<compile_context>
chip_gen: v7x
topology: tpu7x:2x2x1
jax: 0.10.0
libtpu: 0.0.40
codegen_flags: <defaults>
</compile_context>

<pallas_src>
import functools
import math

import jax
import jax.numpy as jnp
from jax import lax
from jax.experimental import pallas as pl
from jax.experimental.pallas import tpu as pltpu

NEG_INF = -1e30  # finite "minus infinity" so masked-row softmax never produces NaN


def _round_up(x, m):
    return (x + m - 1) // m * m


# ---------------------------------------------------------------------------
# Pass 1: fused QKV projection -> head-major Q/V and pre-transposed K in HBM
# ---------------------------------------------------------------------------
def _qkv_proj_kernel(x_ref, wq_ref, wk_ref, wv_ref, q_ref, k_ref, v_ref, *,
                     num_heads, head_dim):
    H, D = num_heads, head_dim
    cd = q_ref.dtype
    x = x_ref[0]                                                    # (TP, C)
    q_all = jnp.dot(x, wq_ref[...], preferred_element_type=jnp.float32)
    k_all = jnp.dot(x, wk_ref[...], preferred_element_type=jnp.float32)
    v_all = jnp.dot(x, wv_ref[...], preferred_element_type=jnp.float32)
    # Head split happens exactly once per row tile (cold path); the attention
    # hot loop is completely free of per-head slicing / transposes.
    for h in range(H):
        sl = slice(h * D, (h + 1) * D)
        q_ref[0, h] = q_all[:, sl].astype(cd)                       # (TP, D)
        k_ref[0, h] = k_all[:, sl].T.astype(cd)                     # (D, TP) pre-T
        v_ref[0, h] = v_all[:, sl].astype(cd)                       # (TP, D)


# ---------------------------------------------------------------------------
# Pass 2: band-limited flash attention + output projection
# ---------------------------------------------------------------------------
def _local_attn_kernel(
    # scalar prefetch
    kt_start_ref,                      # SMEM (nq,) int32: first key tile per q tile
    # inputs
    q_ref,                             # (1, H, TQ, D)  compute dtype (pre-scaled)
    k_ref,                             # (1, H, D, TK)  compute dtype (pre-transposed)
    v_ref,                             # (1, H, TK, D)  compute dtype
    wo_ref,                            # (H, D, C)      compute dtype
    b_ref,                             # (1, C)         f32
    # output
    o_ref,                             # (1, TQ, C)
    # scratch
    m_sc, l_sc, acc_sc,                # (H,TQ,1), (H,TQ,1), (H,TQ,D)  f32
    *, window_left, window_right, seq_len,
):
    TQ = q_ref.shape[2]
    TK = k_ref.shape[3]

    qi = pl.program_id(1)
    kr = pl.program_id(2)
    kt = kt_start_ref[qi] + kr          # absolute key-tile index
    q0 = qi * TQ                        # first query row of this q tile
    k0 = kt * TK                        # first key row of this key tile

    # ---- init online-softmax state (once per query tile) ----------------------
    @pl.when(kr == 0)
    def _init():
        m_sc[...] = jnp.full(m_sc.shape, NEG_INF, m_sc.dtype)
        l_sc[...] = jnp.zeros(l_sc.shape, l_sc.dtype)
        acc_sc[...] = jnp.zeros(acc_sc.shape, acc_sc.dtype)

    # Does this key tile intersect the local band and the real (unpadded) sequence?
    work = ((k0 <= q0 + (TQ - 1) + window_right)
            & (k0 + (TK - 1) >= q0 - window_left)
            & (k0 < seq_len))

    # ---- one key tile of flash-style local attention ---------------------------
    @pl.when(work)
    def _compute():
        q_h = q_ref[0]                  # (H, TQ, D), scale already folded into Wq
        k_h = k_ref[0]                  # (H, D, TK), lane-dense
        v_h = v_ref[0]                  # (H, TK, D)

        s = jnp.einsum('hqd,hdk->hqk', q_h, k_h,
                       preferred_element_type=jnp.float32)          # (H, TQ, TK)

        # tile-local band mask from small (TQ, TK) iotas (absolute offsets)
        rows = q0 + lax.broadcasted_iota(jnp.int32, (TQ, TK), 0)
        cols = k0 + lax.broadcasted_iota(jnp.int32, (TQ, TK), 1)
        delta = cols - rows
        mask = (delta >= -window_left) & (delta <= window_right) & (cols < seq_len)
        s = jnp.where(mask[None], s, NEG_INF)

        m_prev = m_sc[...]
        m_new = jnp.maximum(m_prev, jnp.max(s, axis=-1, keepdims=True))
        alpha = jnp.exp(m_prev - m_new)
        p = jnp.exp(s - m_new)                                       # unnormalized
        l_sc[...] = alpha * l_sc[...] + jnp.sum(p, axis=-1, keepdims=True)
        acc_sc[...] = alpha * acc_sc[...] + jnp.einsum(
            'hqk,hkd->hqd', p.astype(v_h.dtype), v_h,
            preferred_element_type=jnp.float32)
        m_sc[...] = m_new

    # ---- finalize: deferred normalization, head merge, output projection ------
    @pl.when(kr == pl.num_programs(2) - 1)
    def _finalize():
        l = l_sc[...]
        l = jnp.where(l > 0.0, l, 1.0)      # keep padded rows finite (sliced later)
        inv_l = pl.reciprocal(l, approx=True)                        # EUP, ~free
        attn = (acc_sc[...] * inv_l).astype(wo_ref.dtype)            # (H, TQ, D)
        # head merge + proj without any lane-merging relayout:
        #   y[q, c] = sum_h sum_d attn[h, q, d] * wo[h, d, c]
        y = jnp.einsum('hqd,hdc->hqc', attn, wo_ref[...],
                       preferred_element_type=jnp.float32)           # (H, TQ, C)
        y = jnp.sum(y, axis=0) + b_ref[...]                          # (TQ, C)
        o_ref[0] = y.astype(o_ref.dtype)


# ---------------------------------------------------------------------------
# Parameter prep (one-time, hoisted out of the per-call path)
# ---------------------------------------------------------------------------
def prepare_local_attention_params(w_qkv, w_proj, b_proj, *, num_heads,
                                   compute_dtype=jnp.bfloat16):
    """w_qkv: (3C, C) qkv.weight; w_proj: (C, C) proj.weight; b_proj: (C,) proj.bias."""
    w_proj = jnp.asarray(w_proj, jnp.float32)
    C = w_proj.shape[0]
    assert C % num_heads == 0
    D = C // num_heads
    scale = D ** (-0.5)
    w_qkv = jnp.asarray(w_qkv, jnp.float32)
    b_proj = jnp.asarray(b_proj, jnp.float32)
    assert w_qkv.shape == (3 * C, C)
    return dict(
        dim=C, num_heads=num_heads, head_dim=D,
        # softmax scale folded into Wq (applied before the bf16 cast)
        wq=(w_qkv[0 * C:1 * C].T * scale).astype(compute_dtype),     # (C, C)
        wk=w_qkv[1 * C:2 * C].T.astype(compute_dtype),               # (C, C)
        wv=w_qkv[2 * C:3 * C].T.astype(compute_dtype),               # (C, C)
        wo=w_proj.T.reshape(num_heads, D, C).astype(compute_dtype),  # (H, D, C)
        b=b_proj.reshape(1, C).astype(jnp.float32),                  # (1, C)
    )


def _attn_vmem_estimate(H, TQ, TK, D, C, cd_bytes, out_bytes):
    lane = 128
    Dp = _round_up(D, lane)
    Cp = _round_up(C, lane)
    TKp = _round_up(TK, lane)
    blocks = (H * TQ * Dp + H * D * TKp + H * TK * Dp) * cd_bytes    # q, k, v tiles
    blocks += TQ * Cp * out_bytes                                    # output tile
    weights = H * D * Cp * cd_bytes + Cp * 4                         # wo + bias
    scratch = (2 * H * TQ * lane + H * TQ * Dp) * 4                  # m, l, acc
    temps = 3 * H * TQ * TKp * 4 + H * TQ * Cp * 4                   # s/p + proj tmp
    return 2 * blocks + 2 * weights + scratch + temps


# ---------------------------------------------------------------------------
# Wrapper: LocalAttentionLayer.forward
# ---------------------------------------------------------------------------
def local_attention_layer(x, params, *, window_size, block_q=128, block_k=128,
                          compute_dtype=jnp.bfloat16, vmem_limit_bytes=None):
    """x: (B, N, C) -> (B, N, C)."""
    B, N, C = x.shape
    assert C == params['dim'], "params were prepared for a different dim"
    H = params['num_heads']
    D = params['head_dim']
    wl = wr = window_size // 2

    # Tile sizes: clamp to N for tiny sequences (full-dim blocks are always legal).
    if N < block_q or N < block_k:
        TQ = TK = N
    else:
        TQ, TK = block_q, block_k
    lcm = TQ * TK // math.gcd(TQ, TK)
    N_pad = _round_up(N, lcm)
    nq = N_pad // TQ
    nk = N_pad // TK
    TP = TK
    nt = N_pad // TP

    # Key tiles that can intersect each query tile's band (host side, prefetched).
    spans = []
    for qi in range(nq):
        lo = (qi * TQ - wl) // TK
        hi = (qi * TQ + TQ - 1 + wr) // TK
        spans.append(hi - lo + 1)
    n_rel = min(max(spans), nk)
    kt_start = jnp.array(
        [min(max((qi * TQ - wl) // TK, 0), nk - n_rel) for qi in range(nq)],
        dtype=jnp.int32)

    # Pad sequence only (no channel padding needed) and cast activations to bf16.
    x_p = x if N_pad == N else jnp.pad(x, ((0, 0), (0, N_pad - N), (0, 0)))
    x_p = x_p.astype(compute_dtype)

    # ---- pass 1: QKV projection -> head-major q/v and pre-transposed k --------
    proj_kernel = functools.partial(_qkv_proj_kernel, num_heads=H, head_dim=D)
    q_hm, k_hm, v_hm = pl.pallas_call(
        proj_kernel,
        out_shape=(
            jax.ShapeDtypeStruct((B, H, N_pad, D), compute_dtype),
            jax.ShapeDtypeStruct((B, H, D, N_pad), compute_dtype),
            jax.ShapeDtypeStruct((B, H, N_pad, D), compute_dtype),
        ),
        grid_spec=pltpu.PrefetchScalarGridSpec(
            num_scalar_prefetch=0,
            grid=(B, nt),
            in_specs=[
                pl.BlockSpec((1, TP, C), lambda b, t: (b, t, 0)),
                pl.BlockSpec((C, C), lambda b, t: (0, 0)),
                pl.BlockSpec((C, C), lambda b, t: (0, 0)),
                pl.BlockSpec((C, C), lambda b, t: (0, 0)),
            ],
            out_specs=[
                pl.BlockSpec((1, H, TP, D), lambda b, t: (b, 0, t, 0)),
                pl.BlockSpec((1, H, D, TP), lambda b, t: (b, 0, 0, t)),
                pl.BlockSpec((1, H, TP, D), lambda b, t: (b, 0, t, 0)),
            ],
        ),
        compiler_params=pltpu.CompilerParams(
            dimension_semantics=("parallel", "parallel")),
    )(x_p, params['wq'], params['wk'], params['wv'])

    # ---- pass 2: band-limited flash attention + output projection -------------
    if vmem_limit_bytes is None:
        est = _attn_vmem_estimate(H, TQ, TK, D, C,
                                  jnp.dtype(compute_dtype).itemsize,
                                  jnp.dtype(x.dtype).itemsize)
        vmem_limit_bytes = int(min(max(2 * est, 32 * 1024 * 1024),
                                   56 * 1024 * 1024))

    attn_kernel = functools.partial(
        _local_attn_kernel, window_left=wl, window_right=wr, seq_len=N)

    out = pl.pallas_call(
        attn_kernel,
        out_shape=jax.ShapeDtypeStruct((B, N_pad, C), x.dtype),
        grid_spec=pltpu.PrefetchScalarGridSpec(
            num_scalar_prefetch=1,
            grid=(B, nq, n_rel),
            in_specs=[
                pl.BlockSpec((1, H, TQ, D), lambda b, qi, kr, kts: (b, 0, qi, 0)),
                pl.BlockSpec((1, H, D, TK),
                             lambda b, qi, kr, kts: (b, 0, 0, kts[qi] + kr)),
                pl.BlockSpec((1, H, TK, D),
                             lambda b, qi, kr, kts: (b, 0, kts[qi] + kr, 0)),
                pl.BlockSpec((H, D, C), lambda b, qi, kr, kts: (0, 0, 0)),
                pl.BlockSpec((1, C), lambda b, qi, kr, kts: (0, 0)),
            ],
            out_specs=pl.BlockSpec((1, TQ, C), lambda b, qi, kr, kts: (b, qi, 0)),
            scratch_shapes=[
                pltpu.VMEM((H, TQ, 1), jnp.float32),     # running max
                pltpu.VMEM((H, TQ, 1), jnp.float32),     # running sum
                pltpu.VMEM((H, TQ, D), jnp.float32),     # output accumulator
            ],
        ),
        compiler_params=pltpu.CompilerParams(
            dimension_semantics=("parallel", "parallel", "arbitrary"),
            vmem_limit_bytes=vmem_limit_bytes,
        ),
    )(kt_start, q_hm, k_hm, v_hm, params['wo'], params['b'])

    if N_pad != N:
        out = out[:, :N, :]
    return out


# ---------------------------------------------------------------------------
# Pure-JAX f32 reference mirroring the PyTorch forward
# ---------------------------------------------------------------------------
def _reference(x, w_qkv, w_proj, b_proj, num_heads, window_size):
    B, N, C = x.shape
    D = C // num_heads
    scale = D ** (-0.5)
    qkv = x @ w_qkv.T
    qkv = qkv.reshape(B, N, 3, num_heads, D)
    q, k, v = qkv[:, :, 0], qkv[:, :, 1], qkv[:, :, 2]      # (B, N, H, D)
    s = jnp.einsum('bnhd,bmhd->bhnm', q, k) * scale
    i = jnp.arange(N)[:, None]
    j = jnp.arange(N)[None, :]
    wl = window_size // 2
    allowed = (j - i >= -wl) & (j - i <= wl)
    s = jnp.where(allowed[None, None], s, -1e30)
    p = jax.nn.softmax(s, axis=-1)
    o = jnp.einsum('bhnm,bmhd->bnhd', p, v).reshape(B, N, C)
    return o @ w_proj.T + b_proj


if __name__ == "__main__":
    num_heads = 8
    window_size = 13

    def _run_case(B, N, C, seed):
        key = jax.random.PRNGKey(seed)
        kx, kqkv, kw, kb = jax.random.split(key, 4)
        x = jax.random.normal(kx, (B, N, C), dtype=jnp.float32)
        w_qkv = jax.random.normal(kqkv, (3 * C, C), dtype=jnp.float32) * 0.05
        w_proj = jax.random.normal(kw, (C, C), dtype=jnp.float32) * 0.05
        b_proj = jax.random.normal(kb, (C,), dtype=jnp.float32) * 0.05

        params = prepare_local_attention_params(
            w_qkv, w_proj, b_proj, num_heads=num_heads)
        out = local_attention_layer(x, params, window_size=window_size)
        out = jax.block_until_ready(out)

        ref = _reference(x, w_qkv, w_proj, b_proj, num_heads, window_size)
        assert out.shape == (B, N, C)
        # bf16 MXU inputs + approx reciprocal => loose-but-meaningful tolerance.
        assert jnp.allclose(out, ref, atol=3e-2, rtol=3e-2), (
            f"mismatch vs reference (B={B}, N={N}, C={C}), "
            f"max abs err {jnp.max(jnp.abs(out - ref))}")

    # Small primary case (single-tile path).
    _run_case(B=2, N=16, C=64, seed=0)
    # Multi-tile case exercising the banded key loop / online softmax across tiles.
    _run_case(B=1, N=256, C=64, seed=1)

    print("KERNEL_OK")
</pallas_src>

<mosaic_0001>
module attributes {stable_mosaic.version = 11 : i64} {
  func.func @_qkv_proj_kernel(%arg0: i32, %arg1: i32, %arg2: memref<1x16x64xbf16, #tpu.memory_space<vmem>>, %arg3: memref<64x64xbf16, #tpu.memory_space<vmem>>, %arg4: memref<64x64xbf16, #tpu.memory_space<vmem>>, %arg5: memref<64x64xbf16, #tpu.memory_space<vmem>>, %arg6: memref<1x8x16x8xbf16, #tpu.memory_space<vmem>>, %arg7: memref<1x8x8x16xbf16, #tpu.memory_space<vmem>>, %arg8: memref<1x8x16x8xbf16, #tpu.memory_space<vmem>>) attributes {dimension_semantics = [#tpu.dimension_semantics<parallel>, #tpu.dimension_semantics<parallel>], iteration_bounds = array<i64: 2, 1>, scalar_prefetch = 0 : i64, scratch_operands = 0 : i64, tpu.core_type = #tpu.core_type<tc>, window_params = [{transform_indices = @transform_0, window_bounds = array<i64: 1, 16, 64>}, {pipeline_mode = #tpu.pipeline_mode<synchronous>, transform_indices = @transform_1, window_bounds = array<i64: 64, 64>}, {pipeline_mode = #tpu.pipeline_mode<synchronous>, transform_indices = @transform_2, window_bounds = array<i64: 64, 64>}, {pipeline_mode = #tpu.pipeline_mode<synchronous>, transform_indices = @transform_3, window_bounds = array<i64: 64, 64>}, {transform_indices = @transform_4, window_bounds = array<i64: 1, 8, 16, 8>}, {transform_indices = @transform_5, window_bounds = array<i64: 1, 8, 8, 16>}, {transform_indices = @transform_6, window_bounds = array<i64: 1, 8, 16, 8>}]} {
    %c0 = arith.constant 0 : index
    %c0_0 = arith.constant 0 : index
    %c0_1 = arith.constant 0 : index
    %0 = vector.load %arg2[%c0, %c0_0, %c0_1] : memref<1x16x64xbf16, #tpu.memory_space<vmem>>, vector<1x16x64xbf16>
    %1 = vector.shape_cast %0 : vector<1x16x64xbf16> to vector<16x64xbf16>
    %c0_2 = arith.constant 0 : index
    %c0_3 = arith.constant 0 : index
    %2 = vector.load %arg3[%c0_2, %c0_3] : memref<64x64xbf16, #tpu.memory_space<vmem>>, vector<64x64xbf16>
    %cst = arith.constant dense<0.000000e+00> : vector<16x64xf32>
    %3 = tpu.matmul %1, %2, %cst {dimension_numbers = #tpu.dot_dimension_numbers<[1], [0], [0], [1], [0, 0, 1, 1], [], []>} : vector<16x64xbf16>, vector<64x64xbf16>, vector<16x64xf32> -> vector<16x64xf32>
    %c0_4 = arith.constant 0 : index
    %c0_5 = arith.constant 0 : index
    %4 = vector.load %arg4[%c0_4, %c0_5] : memref<64x64xbf16, #tpu.memory_space<vmem>>, vector<64x64xbf16>
    %cst_6 = arith.constant dense<0.000000e+00> : vector<16x64xf32>
    %5 = tpu.matmul %1, %4, %cst_6 {dimension_numbers = #tpu.dot_dimension_numbers<[1], [0], [0], [1], [0, 0, 1, 1], [], []>} : vector<16x64xbf16>, vector<64x64xbf16>, vector<16x64xf32> -> vector<16x64xf32>
    %c0_7 = arith.constant 0 : index
    %c0_8 = arith.constant 0 : index
    %6 = vector.load %arg5[%c0_7, %c0_8] : memref<64x64xbf16, #tpu.memory_space<vmem>>, vector<64x64xbf16>
    %cst_9 = arith.constant dense<0.000000e+00> : vector<16x64xf32>
    %7 = tpu.matmul %1, %6, %cst_9 {dimension_numbers = #tpu.dot_dimension_numbers<[1], [0], [0], [1], [0, 0, 1, 1], [], []>} : vector<16x64xbf16>, vector<64x64xbf16>, vector<16x64xf32> -> vector<16x64xf32>
    %8 = vector.extract_strided_slice %3 {offsets = [0, 0], sizes = [16, 8], strides = [1, 1]} : vector<16x64xf32> to vector<16x8xf32>
    %9 = arith.truncf %8 : vector<16x8xf32> to vector<16x8xbf16>
    %c0_10 = arith.constant 0 : index
    %c0_11 = arith.constant 0 : index
    %c0_12 = arith.constant 0 : index
    %c0_13 = arith.constant 0 : index
    %10 = vector.load %arg6[%c0_10, %c0_11, %c0_12, %c0_13] : memref<1x8x16x8xbf16, #tpu.memory_space<vmem>>, vector<1x1x16x8xbf16>
    %11 = vector.shape_cast %10 : vector<1x1x16x8xbf16> to vector<16x8xbf16>
    %12 = vector.shape_cast %9 : vector<16x8xbf16> to vector<1x1x16x8xbf16>
    tpu.vector_store %arg6[%c0_10, %c0_11, %c0_12, %c0_13], %12 {strides = array<i32>} : memref<1x8x16x8xbf16, #tpu.memory_space<vmem>>, vector<1x1x16x8xbf16>,
    %13 = vector.extract_strided_slice %5 {offsets = [0, 0], sizes = [16, 8], strides = [1, 1]} : vector<16x64xf32> to vector<16x8xf32>
    %14 = tpu.transpose %13, [1, 0] : vector<16x8xf32> -> vector<8x16xf32>
    %15 = arith.truncf %14 : vector<8x16xf32> to vector<8x16xbf16>
    %c0_14 = arith.constant 0 : index
    %c0_15 = arith.constant 0 : index
    %c0_16 = arith.constant 0 : index
    %c0_17 = arith.constant 0 : index
    %16 = vector.load %arg7[%c0_14, %c0_15, %c0_16, %c0_17] : memref<1x8x8x16xbf16, #tpu.memory_space<vmem>>, vector<1x1x8x16xbf16>
    %17 = vector.shape_cast %16 : vector<1x1x8x16xbf16> to vector<8x16xbf16>
    %18 = vector.shape_cast %15 : vector<8x16xbf16> to vector<1x1x8x16xbf16>
    tpu.vector_store %arg7[%c0_14, %c0_15, %c0_16, %c0_17], %18 {strides = array<i32>} : memref<1x8x8x16xbf16, #tpu.memory_space<vmem>>, vector<1x1x8x16xbf16>,
    %19 = vector.extract_strided_slice %7 {offsets = [0, 0], sizes = [16, 8], strides = [1, 1]} : vector<16x64xf32> to vector<16x8xf32>
    %20 = arith.truncf %19 : vector<16x8xf32> to vector<16x8xbf16>
    %c0_18 = arith.constant 0 : index
    %c0_19 = arith.constant 0 : index
    %c0_20 = arith.constant 0 : index
    %c0_21 = arith.constant 0 : index
    %21 = vector.load %arg8[%c0_18, %c0_19, %c0_20, %c0_21] : memref<1x8x16x8xbf16, #tpu.memory_space<vmem>>, vector<1x1x16x8xbf16>
    %22 = vector.shape_cast %21 : vector<1x1x16x8xbf16> to vector<16x8xbf16>
    %23 = vector.shape_cast %20 : vector<16x8xbf16> to vector<1x1x16x8xbf16>
    tpu.vector_store %arg8[%c0_18, %c0_19, %c0_20, %c0_21], %23 {strides = array<i32>} : memref<1x8x16x8xbf16, #tpu.memory_space<vmem>>, vector<1x1x16x8xbf16>,
    %24 = vector.extract_strided_slice %3 {offsets = [0, 8], sizes = [16, 8], strides = [1, 1]} : vector<16x64xf32> to vector<16x8xf32>
    %25 = arith.truncf %24 : vector<16x8xf32> to vector<16x8xbf16>
    %c0_22 = arith.constant 0 : index
    %c1 = arith.constant 1 : index
    %c0_23 = arith.constant 0 : index
    %c0_24 = arith.constant 0 : index
    %26 = vector.load %arg6[%c0_22, %c1, %c0_23, %c0_24] : memref<1x8x16x8xbf16, #tpu.memory_space<vmem>>, vector<1x1x16x8xbf16>
    %27 = vector.shape_cast %26 : vector<1x1x16x8xbf16> to vector<16x8xbf16>
    %28 = vector.shape_cast %25 : vector<16x8xbf16> to vector<1x1x16x8xbf16>
    tpu.vector_store %arg6[%c0_22, %c1, %c0_23, %c0_24], %28 {strides = array<i32>} : memref<1x8x16x8xbf16, #tpu.memory_space<vmem>>, vector<1x1x16x8xbf16>,
    %29 = vector.extract_strided_slice %5 {offsets = [0, 8], sizes = [16, 8], strides = [1, 1]} : vector<16x64xf32> to vector<16x8xf32>
    %30 = tpu.transpose %29, [1, 0] : vector<16x8xf32> -> vector<8x16xf32>
    %31 = arith.truncf %30 : vector<8x16xf32> to vector<8x16xbf16>
    %c0_25 = arith.constant 0 : index
    %c1_26 = arith.constant 1 : index
    %c0_27 = arith.constant 0 : index
    %c0_28 = arith.constant 0 : index
    %32 = vector.load %arg7[%c0_25, %c1_26, %c0_27, %c0_28] : memref<1x8x8x16xbf16, #tpu.memory_space<vmem>>, vector<1x1x8x16xbf16>
    %33 = vector.shape_cast %32 : vector<1x1x8x16xbf16> to vector<8x16xbf16>
    %34 = vector.shape_cast %31 : vector<8x16xbf16> to vector<1x1x8x16xbf16>
    tpu.vector_store %arg7[%c0_25, %c1_26, %c0_27, %c0_28], %34 {strides = array<i32>} : memref<1x8x8x16xbf16, #tpu.memory_space<vmem>>, vector<1x1x8x16xbf16>,
    %35 = vector.extract_strided_slice %7 {offsets = [0, 8], sizes = [16, 8], strides = [1, 1]} : vector<16x64xf32> to vector<16x8xf32>
    %36 = arith.truncf %35 : vector<16x8xf32> to vector<16x8xbf16>
    %c0_29 = arith.constant 0 : index
    %c1_30 = arith.constant 1 : index
    %c0_31 = arith.constant 0 : index
    %c0_32 = arith.constant 0 : index
    %37 = vector.load %arg8[%c0_29, %c1_30, %c0_31, %c0_32] : memref<1x8x16x8xbf16, #tpu.memory_space<vmem>>, vector<1x1x16x8xbf16>
    %38 = vector.shape_cast %37 : vector<1x1x16x8xbf16> to vector<16x8xbf16>
    %39 = vector.shape_cast %36 : vector<16x8xbf16> to vector<1x1x16x8xbf16>
    tpu.vector_store %arg8[%c0_29, %c1_30, %c0_31, %c0_32], %39 {strides = array<i32>} : memref<1x8x16x8xbf16, #tpu.memory_space<vmem>>, vector<1x1x16x8xbf16>,
    %40 = vector.extract_strided_slice %3 {offsets = [0, 16], sizes = [16, 8], strides = [1, 1]} : vector<16x64xf32> to vector<16x8xf32>
    %41 = arith.truncf %40 : vector<16x8xf32> to vector<16x8xbf16>
    %c0_33 = arith.constant 0 : index
    %c2 = arith.constant 2 : index
    %c0_34 = arith.constant 0 : index
    %c0_35 = arith.constant 0 : index
    %42 = vector.load %arg6[%c0_33, %c2, %c0_34, %c0_35] : memref<1x8x16x8xbf16, #tpu.memory_space<vmem>>, vector<1x1x16x8xbf16>
    %43 = vector.shape_cast %42 : vector<1x1x16x8xbf16> to vector<16x8xbf16>
    %44 = vector.shape_cast %41 : vector<16x8xbf16> to vector<1x1x16x8xbf16>
    tpu.vector_store %arg6[%c0_33, %c2, %c0_34, %c0_35], %44 {strides = array<i32>} : memref<1x8x16x8xbf16, #tpu.memory_space<vmem>>, vector<1x1x16x8xbf16>,
    %45 = vector.extract_strided_slice %5 {offsets = [0, 16], sizes = [16, 8], strides = [1, 1]} : vector<16x64xf32> to vector<16x8xf32>
    %46 = tpu.transpose %45, [1, 0] : vector<16x8xf32> -> vector<8x16xf32>
    %47 = arith.truncf %46 : vector<8x16xf32> to vector<8x16xbf16>
    %c0_36 = arith.constant 0 : index
    %c2_37 = arith.constant 2 : index
    %c0_38 = arith.constant 0 : index
    %c0_39 = arith.constant 0 : index
    %48 = vector.load %arg7[%c0_36, %c2_37, %c0_38, %c0_39] : memref<1x8x8x16xbf16, #tpu.memory_space<vmem>>, vector<1x1x8x16xbf16>
    %49 = vector.shape_cast %48 : vector<1x1x8x16xbf16> to vector<8x16xbf16>
    %50 = vector.shape_cast %47 : vector<8x16xbf16> to vector<1x1x8x16xbf16>
    tpu.vector_store %arg7[%c0_36, %c2_37, %c0_38, %c0_39], %50 {strides = array<i32>} : memref<1x8x8x16xbf16, #tpu.memory_space<vmem>>, vector<1x1x8x16xbf16>,
    %51 = vector.extract_strided_slice %7 {offsets = [0, 16], sizes = [16, 8], strides = [1, 1]} : vector<16x64xf32> to vector<16x8xf32>
    %52 = arith.truncf %51 : vector<16x8xf32> to vector<16x8xbf16>
    %c0_40 = arith.constant 0 : index
    %c2_41 = arith.constant 2 : index
    %c0_42 = arith.constant 0 : index
    %c0_43 = arith.constant 0 : index
    %53 = vector.load %arg8[%c0_40, %c2_41, %c0_42, %c0_43] : memref<1x8x16x8xbf16, #tpu.memory_space<vmem>>, vector<1x1x16x8xbf16>
    %54 = vector.shape_cast %53 : vector<1x1x16x8xbf16> to vector<16x8xbf16>
    %55 = vector.shape_cast %52 : vector<16x8xbf16> to vector<1x1x16x8xbf16>
    tpu.vector_store %arg8[%c0_40, %c2_41, %c0_42, %c0_43], %55 {strides = array<i32>} : memref<1x8x16x8xbf16, #tpu.memory_space<vmem>>, vector<1x1x16x8xbf16>,
    %56 = vector.extract_strided_slice %3 {offsets = [0, 24], sizes = [16, 8], strides = [1, 1]} : vector<16x64xf32> to vector<16x8xf32>
    %57 = arith.truncf %56 : vector<16x8xf32> to vector<16x8xbf16>
    %c0_44 = arith.constant 0 : index
    %c3 = arith.constant 3 : index
    %c0_45 = arith.constant 0 : index
    %c0_46 = arith.constant 0 : index
    %58 = vector.load %arg6[%c0_44, %c3, %c0_45, %c0_46] : memref<1x8x16x8xbf16, #tpu.memory_space<vmem>>, vector<1x1x16x8xbf16>
    %59 = vector.shape_cast %58 : vector<1x1x16x8xbf16> to vector<16x8xbf16>
    %60 = vector.shape_cast %57 : vector<16x8xbf16> to vector<1x1x16x8xbf16>
    tpu.vector_store %arg6[%c0_44, %c3, %c0_45, %c0_46], %60 {strides = array<i32>} : memref<1x8x16x8xbf16, #tpu.memory_space<vmem>>, vector<1x1x16x8xbf16>,
    %61 = vector.extract_strided_slice %5 {offsets = [0, 24], sizes = [16, 8], strides = [1, 1]} : vector<16x64xf32> to vector<16x8xf32>
    %62 = tpu.transpose %61, [1, 0] : vector<16x8xf32> -> vector<8x16xf32>
    %63 = arith.truncf %62 : vector<8x16xf32> to vector<8x16xbf16>
    %c0_47 = arith.constant 0 : index
    %c3_48 = arith.constant 3 : index
    %c0_49 = arith.constant 0 : index
    %c0_50 = arith.constant 0 : index
    %64 = vector.load %arg7[%c0_47, %c3_48, %c0_49, %c0_50] : memref<1x8x8x16xbf16, #tpu.memory_space<vmem>>, vector<1x1x8x16xbf16>
    %65 = vector.shape_cast %64 : vector<1x1x8x16xbf16> to vector<8x16xbf16>
    %66 = vector.shape_cast %63 : vector<8x16xbf16> to vector<1x1x8x16xbf16>
    tpu.vector_store %arg7[%c0_47, %c3_48, %c0_49, %c0_50], %66 {strides = array<i32>} : memref<1x8x8x16xbf16, #tpu.memory_space<vmem>>, vector<1x1x8x16xbf16>,
    %67 = vector.extract_strided_slice %7 {offsets = [0, 24], sizes = [16, 8], strides = [1, 1]} : vector<16x64xf32> to vector<16x8xf32>
    %68 = arith.truncf %67 : vector<16x8xf32> to vector<16x8xbf16>
    %c0_51 = arith.constant 0 : index
    %c3_52 = arith.constant 3 : index
    %c0_53 = arith.constant 0 : index
    %c0_54 = arith.constant 0 : index
    %69 = vector.load %arg8[%c0_51, %c3_52, %c0_53, %c0_54] : memref<1x8x16x8xbf16, #tpu.memory_space<vmem>>, vector<1x1x16x8xbf16>
    %70 = vector.shape_cast %69 : vector<1x1x16x8xbf16> to vector<16x8xbf16>
    %71 = vector.shape_cast %68 : vector<16x8xbf16> to vector<1x1x16x8xbf16>
    tpu.vector_store %arg8[%c0_51, %c3_52, %c0_53, %c0_54], %71 {strides = array<i32>} : memref<1x8x16x8xbf16, #tpu.memory_space<vmem>>, vector<1x1x16x8xbf16>,
    %72 = vector.extract_strided_slice %3 {offsets = [0, 32], sizes = [16, 8], strides = [1, 1]} : vector<16x64xf32> to vector<16x8xf32>
    %73 = arith.truncf %72 : vector<16x8xf32> to vector<16x8xbf16>
    %c0_55 = arith.constant 0 : index
    %c4 = arith.constant 4 : index
    %c0_56 = arith.constant 0 : index
    %c0_57 = arith.constant 0 : index
    %74 = vector.load %arg6[%c0_55, %c4, %c0_56, %c0_57] : memref<1x8x16x8xbf16, #tpu.memory_space<vmem>>, vector<1x1x16x8xbf16>
    %75 = vector.shape_cast %74 : vector<1x1x16x8xbf16> to vector<16x8xbf16>
    %76 = vector.shape_cast %73 : vector<16x8xbf16> to vector<1x1x16x8xbf16>
    tpu.vector_store %arg6[%c0_55, %c4, %c0_56, %c0_57], %76 {strides = array<i32>} : memref<1x8x16x8xbf16, #tpu.memory_space<vmem>>, vector<1x1x16x8xbf16>,
    %77 = vector.extract_strided_slice %5 {offsets = [0, 32], sizes = [16, 8], strides = [1, 1]} : vector<16x64xf32> to vector<16x8xf32>
    %78 = tpu.transpose %77, [1, 0] : vector<16x8xf32> -> vector<8x16xf32>
    %79 = arith.truncf %78 : vector<8x16xf32> to vector<8x16xbf16>
    %c0_58 = arith.constant 0 : index
    %c4_59 = arith.constant 4 : index
    %c0_60 = arith.constant 0 : index
    %c0_61 = arith.constant 0 : index
    %80 = vector.load %arg7[%c0_58, %c4_59, %c0_60, %c0_61] : memref<1x8x8x16xbf16, #tpu.memory_space<vmem>>, vector<1x1x8x16xbf16>
    %81 = vector.shape_cast %80 : vector<1x1x8x16xbf16> to vector<8x16xbf16>
    %82 = vector.shape_cast %79 : vector<8x16xbf16> to vector<1x1x8x16xbf16>
    tpu.vector_store %arg7[%c0_58, %c4_59, %c0_60, %c0_61], %82 {strides = array<i32>} : memref<1x8x8x16xbf16, #tpu.memory_space<vmem>>, vector<1x1x8x16xbf16>,
    %83 = vector.extract_strided_slice %7 {offsets = [0, 32], sizes = [16, 8], strides = [1, 1]} : vector<16x64xf32> to vector<16x8xf32>
    %84 = arith.truncf %83 : vector<16x8xf32> to vector<16x8xbf16>
    %c0_62 = arith.constant 0 : index
    %c4_63 = arith.constant 4 : index
    %c0_64 = arith.constant 0 : index
    %c0_65 = arith.constant 0 : index
    %85 = vector.load %arg8[%c0_62, %c4_63, %c0_64, %c0_65] : memref<1x8x16x8xbf16, #tpu.memory_space<vmem>>, vector<1x1x16x8xbf16>
    %86 = vector.shape_cast %85 : vector<1x1x16x8xbf16> to vector<16x8xbf16>
    %87 = vector.shape_cast %84 : vector<16x8xbf16> to vector<1x1x16x8xbf16>
    tpu.vector_store %arg8[%c0_62, %c4_63, %c0_64, %c0_65], %87 {strides = array<i32>} : memref<1x8x16x8xbf16, #tpu.memory_space<vmem>>, vector<1x1x16x8xbf16>,
    %88 = vector.extract_strided_slice %3 {offsets = [0, 40], sizes = [16, 8], strides = [1, 1]} : vector<16x64xf32> to vector<16x8xf32>
    %89 = arith.truncf %88 : vector<16x8xf32> to vector<16x8xbf16>
    %c0_66 = arith.constant 0 : index
    %c5 = arith.constant 5 : index
    %c0_67 = arith.constant 0 : index
    %c0_68 = arith.constant 0 : index
    %90 = vector.load %arg6[%c0_66, %c5, %c0_67, %c0_68] : memref<1x8x16x8xbf16, #tpu.memory_space<vmem>>, vector<1x1x16x8xbf16>
    %91 = vector.shape_cast %90 : vector<1x1x16x8xbf16> to vector<16x8xbf16>
    %92 = vector.shape_cast %89 : vector<16x8xbf16> to vector<1x1x16x8xbf16>
    tpu.vector_store %arg6[%c0_66, %c5, %c0_67, %c0_68], %92 {strides = array<i32>} : memref<1x8x16x8xbf16, #tpu.memory_space<vmem>>, vector<1x1x16x8xbf16>,
    %93 = vector.extract_strided_slice %5 {offsets = [0, 40], sizes = [16, 8], strides = [1, 1]} : vector<16x64xf32> to vector<16x8xf32>
    %94 = tpu.transpose %93, [1, 0] : vector<16x8xf32> -> vector<8x16xf32>
    %95 = arith.truncf %94 : vector<8x16xf32> to vector<8x16xbf16>
    %c0_69 = arith.constant 0 : index
    %c5_70 = arith.constant 5 : index
    %c0_71 = arith.constant 0 : index
    %c0_72 = arith.constant 0 : index
    %96 = vector.load %arg7[%c0_69, %c5_70, %c0_71, %c0_72] : memref<1x8x8x16xbf16, #tpu.memory_space<vmem>>, vector<1x1x8x16xbf16>
    %97 = vector.shape_cast %96 : vector<1x1x8x16xbf16> to vector<8x16xbf16>
    %98 = vector.shape_cast %95 : vector<8x16xbf16> to vector<1x1x8x16xbf16>
    tpu.vector_store %arg7[%c0_69, %c5_70, %c0_71, %c0_72], %98 {strides = array<i32>} : memref<1x8x8x16xbf16, #tpu.memory_space<vmem>>, vector<1x1x8x16xbf16>,
    %99 = vector.extract_strided_slice %7 {offsets = [0, 40], sizes = [16, 8], strides = [1, 1]} : vector<16x64xf32> to vector<16x8xf32>
    %100 = arith.truncf %99 : vector<16x8xf32> to vector<16x8xbf16>
    %c0_73 = arith.constant 0 : index
    %c5_74 = arith.constant 5 : index
    %c0_75 = arith.constant 0 : index
    %c0_76 = arith.constant 0 : index
    %101 = vector.load %arg8[%c0_73, %c5_74, %c0_75, %c0_76] : memref<1x8x16x8xbf16, #tpu.memory_space<vmem>>, vector<1x1x16x8xbf16>
    %102 = vector.shape_cast %101 : vector<1x1x16x8xbf16> to vector<16x8xbf16>
    %103 = vector.shape_cast %100 : vector<16x8xbf16> to vector<1x1x16x8xbf16>
    tpu.vector_store %arg8[%c0_73, %c5_74, %c0_75, %c0_76], %103 {strides = array<i32>} : memref<1x8x16x8xbf16, #tpu.memory_space<vmem>>, vector<1x1x16x8xbf16>,
    %104 = vector.extract_strided_slice %3 {offsets = [0, 48], sizes = [16, 8], strides = [1, 1]} : vector<16x64xf32> to vector<16x8xf32>
    %105 = arith.truncf %104 : vector<16x8xf32> to vector<16x8xbf16>
    %c0_77 = arith.constant 0 : index
    %c6 = arith.constant 6 : index
    %c0_78 = arith.constant 0 : index
    %c0_79 = arith.constant 0 : index
    %106 = vector.load %arg6[%c0_77, %c6, %c0_78, %c0_79] : memref<1x8x16x8xbf16, #tpu.memory_space<vmem>>, vector<1x1x16x8xbf16>
    %107 = vector.shape_cast %106 : vector<1x1x16x8xbf16> to vector<16x8xbf16>
    %108 = vector.shape_cast %105 : vector<16x8xbf16> to vector<1x1x16x8xbf16>
    tpu.vector_store %arg6[%c0_77, %c6, %c0_78, %c0_79], %108 {strides = array<i32>} : memref<1x8x16x8xbf16, #tpu.memory_space<vmem>>, vector<1x1x16x8xbf16>,
    %109 = vector.extract_strided_slice %5 {offsets = [0, 48], sizes = [16, 8], strides = [1, 1]} : vector<16x64xf32> to vector<16x8xf32>
    %110 = tpu.transpose %109, [1, 0] : vector<16x8xf32> -> vector<8x16xf32>
    %111 = arith.truncf %110 : vector<8x16xf32> to vector<8x16xbf16>
    %c0_80 = arith.constant 0 : index
    %c6_81 = arith.constant 6 : index
    %c0_82 = arith.constant 0 : index
    %c0_83 = arith.constant 0 : index
    %112 = vector.load %arg7[%c0_80, %c6_81, %c0_82, %c0_83] : memref<1x8x8x16xbf16, #tpu.memory_space<vmem>>, vector<1x1x8x16xbf16>
    %113 = vector.shape_cast %112 : vector<1x1x8x16xbf16> to vector<8x16xbf16>
    %114 = vector.shape_cast %111 : vector<8x16xbf16> to vector<1x1x8x16xbf16>
    tpu.vector_store %arg7[%c0_80, %c6_81, %c0_82, %c0_83], %114 {strides = array<i32>} : memref<1x8x8x16xbf16, #tpu.memory_space<vmem>>, vector<1x1x8x16xbf16>,
    %115 = vector.extract_strided_slice %7 {offsets = [0, 48], sizes = [16, 8], strides = [1, 1]} : vector<16x64xf32> to vector<16x8xf32>
    %116 = arith.truncf %115 : vector<16x8xf32> to vector<16x8xbf16>
    %c0_84 = arith.constant 0 : index
    %c6_85 = arith.constant 6 : index
    %c0_86 = arith.constant 0 : index
    %c0_87 = arith.constant 0 : index
    %117 = vector.load %arg8[%c0_84, %c6_85, %c0_86, %c0_87] : memref<1x8x16x8xbf16, #tpu.memory_space<vmem>>, vector<1x1x16x8xbf16>
    %118 = vector.shape_cast %117 : vector<1x1x16x8xbf16> to vector<16x8xbf16>
    %119 = vector.shape_cast %116 : vector<16x8xbf16> to vector<1x1x16x8xbf16>
    tpu.vector_store %arg8[%c0_84, %c6_85, %c0_86, %c0_87], %119 {strides = array<i32>} : memref<1x8x16x8xbf16, #tpu.memory_space<vmem>>, vector<1x1x16x8xbf16>,
    %120 = vector.extract_strided_slice %3 {offsets = [0, 56], sizes = [16, 8], strides = [1, 1]} : vector<16x64xf32> to vector<16x8xf32>
    %121 = arith.truncf %120 : vector<16x8xf32> to vector<16x8xbf16>
    %c0_88 = arith.constant 0 : index
    %c7 = arith.constant 7 : index
    %c0_89 = arith.constant 0 : index
    %c0_90 = arith.constant 0 : index
    %122 = vector.load %arg6[%c0_88, %c7, %c0_89, %c0_90] : memref<1x8x16x8xbf16, #tpu.memory_space<vmem>>, vector<1x1x16x8xbf16>
    %123 = vector.shape_cast %122 : vector<1x1x16x8xbf16> to vector<16x8xbf16>
    %124 = vector.shape_cast %121 : vector<16x8xbf16> to vector<1x1x16x8xbf16>
    tpu.vector_store %arg6[%c0_88, %c7, %c0_89, %c0_90], %124 {strides = array<i32>} : memref<1x8x16x8xbf16, #tpu.memory_space<vmem>>, vector<1x1x16x8xbf16>,
    %125 = vector.extract_strided_slice %5 {offsets = [0, 56], sizes = [16, 8], strides = [1, 1]} : vector<16x64xf32> to vector<16x8xf32>
    %126 = tpu.transpose %125, [1, 0] : vector<16x8xf32> -> vector<8x16xf32>
    %127 = arith.truncf %126 : vector<8x16xf32> to vector<8x16xbf16>
    %c0_91 = arith.constant 0 : index
    %c7_92 = arith.constant 7 : index
    %c0_93 = arith.constant 0 : index
    %c0_94 = arith.constant 0 : index
    %128 = vector.load %arg7[%c0_91, %c7_92, %c0_93, %c0_94] : memref<1x8x8x16xbf16, #tpu.memory_space<vmem>>, vector<1x1x8x16xbf16>
    %129 = vector.shape_cast %128 : vector<1x1x8x16xbf16> to vector<8x16xbf16>
    %130 = vector.shape_cast %127 : vector<8x16xbf16> to vector<1x1x8x16xbf16>
    tpu.vector_store %arg7[%c0_91, %c7_92, %c0_93, %c0_94], %130 {strides = array<i32>} : memref<1x8x8x16xbf16, #tpu.memory_space<vmem>>, vector<1x1x8x16xbf16>,
    %131 = vector.extract_strided_slice %7 {offsets = [0, 56], sizes = [16, 8], strides = [1, 1]} : vector<16x64xf32> to vector<16x8xf32>
    %132 = arith.truncf %131 : vector<16x8xf32> to vector<16x8xbf16>
    %c0_95 = arith.constant 0 : index
    %c7_96 = arith.constant 7 : index
    %c0_97 = arith.constant 0 : index
    %c0_98 = arith.constant 0 : index
    %133 = vector.load %arg8[%c0_95, %c7_96, %c0_97, %c0_98] : memref<1x8x16x8xbf16, #tpu.memory_space<vmem>>, vector<1x1x16x8xbf16>
    %134 = vector.shape_cast %133 : vector<1x1x16x8xbf16> to vector<16x8xbf16>
    %135 = vector.shape_cast %132 : vector<16x8xbf16> to vector<1x1x16x8xbf16>
    tpu.vector_store %arg8[%c0_95, %c7_96, %c0_97, %c0_98], %135 {strides = array<i32>} : memref<1x8x16x8xbf16, #tpu.memory_space<vmem>>, vector<1x1x16x8xbf16>,
    return
  }
  func.func @transform_0(%arg0: i32, %arg1: i32) -> (i32, i32, i32) {
    %c0_i32 = arith.constant 0 : i32
    %c0_i32_0 = arith.constant 0 : i32
    return %arg0, %arg1, %c0_i32 : i32, i32, i32
  }
  func.func @transform_1(%arg0: i32, %arg1: i32) -> (i32, i32) {
    %c0_i32 = arith.constant 0 : i32
    %c0_i32_0 = arith.constant 0 : i32
    %c0_i32_1 = arith.constant 0 : i32
    return %c0_i32, %c0_i32_0 : i32, i32
  }
  func.func @transform_2(%arg0: i32, %arg1: i32) -> (i32, i32) {
    %c0_i32 = arith.constant 0 : i32
    %c0_i32_0 = arith.constant 0 : i32
    %c0_i32_1 = arith.constant 0 : i32
    return %c0_i32, %c0_i32_0 : i32, i32
  }
  func.func @transform_3(%arg0: i32, %arg1: i32) -> (i32, i32) {
    %c0_i32 = arith.constant 0 : i32
    %c0_i32_0 = arith.constant 0 : i32
    %c0_i32_1 = arith.constant 0 : i32
    return %c0_i32, %c0_i32_0 : i32, i32
  }
  func.func @transform_4(%arg0: i32, %arg1: i32) -> (i32, i32, i32, i32) {
    %c0_i32 = arith.constant 0 : i32
    %c0_i32_0 = arith.constant 0 : i32
    %c0_i32_1 = arith.constant 0 : i32
    return %arg0, %c0_i32, %arg1, %c0_i32_0 : i32, i32, i32, i32
  }
  func.func @transform_5(%arg0: i32, %arg1: i32) -> (i32, i32, i32, i32) {
    %c0_i32 = arith.constant 0 : i32
    %c0_i32_0 = arith.constant 0 : i32
    %c0_i32_1 = arith.constant 0 : i32
    return %arg0, %c0_i32, %c0_i32_0, %arg1 : i32, i32, i32, i32
  }
  func.func @transform_6(%arg0: i32, %arg1: i32) -> (i32, i32, i32, i32) {
    %c0_i32 = arith.constant 0 : i32
    %c0_i32_0 = arith.constant 0 : i32
    %c0_i32_1 = arith.constant 0 : i32
    return %arg0, %c0_i32, %arg1, %c0_i32_0 : i32, i32, i32, i32
  }
}

</mosaic_0001>

<llo_original>
// kernel: tpu_custom_call.1
$region0: #{tpu_custom_call.1}
  #allocation0 [shape = 'u32[]', space=smem, size = 0x4, offset = 0x4, fixed_abs, tag = 'smem constant byte address 0x4 - core index']
  #allocation1 [shape = 'u32[144,128]{1,0:T(1,128)}', space=vmem, size = 0x12000, scoped, tag = 'internal scratch']
  %s0 = inlined_call_operand.hbm [shape: bf16[2,16,64], index: 0, kind: input, shape index: {}]
  %s1 = inlined_call_operand.hbm [shape: bf16[64,64], index: 1, kind: input, shape index: {}]
  %s2 = inlined_call_operand.hbm [shape: bf16[64,64], index: 2, kind: input, shape index: {}]
  %s3 = inlined_call_operand.hbm [shape: bf16[64,64], index: 3, kind: input, shape index: {}]
  %s4 = inlined_call_operand.vmem [shape: bf16[2,8,16,8], index: 4, kind: output, shape index: {0}]
  %s5 = inlined_call_operand.hbm [shape: bf16[2,8,8,16], index: 5, kind: output, shape index: {1}]
  %s6 = inlined_call_operand.vmem [shape: bf16[2,8,16,8], index: 6, kind: output, shape index: {2}]
  %7 = xla_tuple %s4, %s5, %s6
  %s8 = sld [smem:[#allocation0]]
  $region81: #{tpu_custom_call.1} parent=0
    _
  %s10 = ssub.s32 1, %s8
  %s11 = scalar_select 0, %s10, %s8
  $region1: #{tpu_custom_call.1} parent=0
    #allocation2 [shape = 'u8[8192]{0}', space=vmem, size = 0x2000, scoped, tag = 'input window, operand 0']
    #allocation3 [shape = 's32[2]{0}', space=sflag, size = 0x8, scoped, tag = 'scoped memory for tpu_custom_call.1']
    #allocation4 [shape = 's32[2]{0}', space=sflag, size = 0x8, scoped, tag = 'scoped memory for tpu_custom_call.1']
    #allocation5 [shape = 'u8[16384]{0}', space=vmem, size = 0x4000, scoped, tag = 'input window, operand 1, single buffered']
    #allocation6 [shape = 's32[1]{0}', space=sflag, size = 0x4, scoped, tag = 'scoped memory for tpu_custom_call.1']
    #allocation7 [shape = 'u8[16384]{0}', space=vmem, size = 0x4000, scoped, tag = 'input window, operand 2, single buffered']
    #allocation8 [shape = 'u8[16384]{0}', space=vmem, size = 0x4000, scoped, tag = 'input window, operand 3, single buffered']
    #allocation9 [shape = 's32[1]{0}', space=sflag, size = 0x4, scoped, tag = 'scoped memory for tpu_custom_call.1']
    #allocation10 [shape = 'u8[32768]{0}', space=vmem, size = 0x8000, scoped, tag = 'output window, operand 1']
    %12 = vsyncpa [#allocation3], 0
    %s13 = scalar_lea.sflag [#allocation3], 1
    %14 = vsyncpa %s13, 0
    %15 = vsyncpa [#allocation6], 0
    %16 = vsyncpa [#allocation9], 0
    %17 = vsyncpa [#allocation4], 0
    %s18 = scalar_lea.sflag [#allocation4], 1
    %19 = vsyncpa %s18, 0
    loop: start=0, step=1, limit=4
    $region2: #{tpu_custom_call.1} parent=1 // loop_pre_header
      _
    $region3: #{tpu_custom_call.1} parent=1 // loop_header
      %s21 = sphi 0, %s25
      %p22 = scmp.ge.s32.totalorder %s21, 4
      %s28 = sphi 0, %s40
      %s29 = sphi 0, %s36
      %s30 = sphi 0, %s28
      %s31 = sphi 0, %s29
      %s32 = sphi 0, %s30
      %s33 = sphi 0, %s31
      %s45 = sphi 0, %s47
      %s48 = sphi 0, %s45
      %s49 = sphi 0, %s48
      %s65 = sphi 0, %s49
      %s69 = sphi 0, %s69
      %s71 = sphi 0, %s69
      %s72 = sphi 0, %s71
      %s86 = sphi 0, %s72
      %s90 = sphi 0, %s90
      %s92 = sphi 0, %s90
      %s93 = sphi 0, %s92
      %s107 = sphi 0, %s93
      %s111 = sphi 0, %s111
      %s113 = sphi 0, %s111
      %s114 = sphi 0, %s113
      %s128 = sphi 0, %s114
      %s136 = sphi 0, %s138
      %s139 = sphi 0, %s136
      %s140 = sphi 0, %s139
      %s156 = sphi 0, %s140
      %s164 = sphi 0, %s166
      %s167 = sphi 0, %s164
      %s168 = sphi 0, %s167
      %s184 = sphi 0, %s168
      %s192 = sphi 0, %s194
      %s195 = sphi 0, %s192
      %s196 = sphi 0, %s195
      %s212 = sphi 0, %s196
    $region4: #{tpu_custom_call.1} parent=1 // loop_header_branch
      %24 = sbr.rel (%p22) target = $region8
    $region5: #{tpu_custom_call.1} parent=1 // loop_body
      %s26 = ssub.s32 %s21, 1
      %s27 = ssub.s32 %s21, 2
      %s34 = sadd.s32 1, %s29
      %p35 = scmp.ge.s32.totalorder %s34, 1
      %s36 = scalar_select %p35, 0, %s34
      %s37 = sadd.s32 1, %s28
      %s38 = scalar_select %p35, %s37, %s28
      %p39 = scmp.ge.s32.totalorder %s38, 2
      %s40 = scalar_select %p39, 0, %s38
      %s41 = ssub.s32 %s28, %s40
      %s42 = ssub.s32 %s29, %s36
      %s43 = sor.u32 %s41, %s42
      %p44 = scmp.eq.s32.totalorder %s43, 0
      %s46 = sadd.s32 %s45, 1
      %s47 = scalar_select %p44, %s45, %s46
      %p50 = pneg %p44
      %p51 = scmp.eq.s32.totalorder %s21, 1
      %p52 = por %p50, %p51
      %p53 = scmp.ne.s32.totalorder %s45, %s48
      %p54 = scmp.eq.s32.totalorder %s21, 0
      %p55 = por %p53, %p54
      %p56 = scmp.ne.s32.totalorder %s45, %s48
      %p57 = scmp.eq.s32.totalorder %s26, 1
      %p58 = por %p56, %p57
      %p59 = scmp.ne.s32.totalorder %s48, %s49
      %p60 = scmp.eq.s32.totalorder %s26, 0
      %p61 = por %p59, %p60
      %p62 = scmp.ne.s32.totalorder %s48, %s49
      %p63 = scmp.eq.s32.totalorder %s27, 1
      %p64 = por %p62, %p63
      %p66 = scmp.ne.s32.totalorder %s49, %s65
      %p67 = scmp.eq.s32.totalorder %s27, 0
      %p68 = por %p66, %p67
      %s70 = sadd.s32 %s69, 1
      %p73 = scmp.eq.s32.totalorder %s21, 1
      %p74 = scmp.ne.s32.totalorder %s69, %s71
      %p75 = scmp.eq.s32.totalorder %s21, 0
      %p76 = por %p74, %p75
      %p77 = scmp.ne.s32.totalorder %s69, %s71
      %p78 = scmp.eq.s32.totalorder %s26, 1
      %p79 = por %p77, %p78
      %p80 = scmp.ne.s32.totalorder %s71, %s72
      %p81 = scmp.eq.s32.totalorder %s26, 0
      %p82 = por %p80, %p81
      %p83 = scmp.ne.s32.totalorder %s71, %s72
      %p84 = scmp.eq.s32.totalorder %s27, 1
      %p85 = por %p83, %p84
      %p87 = scmp.ne.s32.totalorder %s72, %s86
      %p88 = scmp.eq.s32.totalorder %s27, 0
      %p89 = por %p87, %p88
      %s91 = sadd.s32 %s90, 1
      %p94 = scmp.eq.s32.totalorder %s21, 1
      %p95 = scmp.ne.s32.totalorder %s90, %s92
      %p96 = scmp.eq.s32.totalorder %s21, 0
      %p97 = por %p95, %p96
      %p98 = scmp.ne.s32.totalorder %s90, %s92
      %p99 = scmp.eq.s32.totalorder %s26, 1
      %p100 = por %p98, %p99
      %p101 = scmp.ne.s32.totalorder %s92, %s93
      %p102 = scmp.eq.s32.totalorder %s26, 0
      %p103 = por %p101, %p102
      %p104 = scmp.ne.s32.totalorder %s92, %s93
      %p105 = scmp.eq.s32.totalorder %s27, 1
      %p106 = por %p104, %p105
      %p108 = scmp.ne.s32.totalorder %s93, %s107
      %p109 = scmp.eq.s32.totalorder %s27, 0
      %p110 = por %p108, %p109
      %s112 = sadd.s32 %s111, 1
      %p115 = scmp.eq.s32.totalorder %s21, 1
      %p116 = scmp.ne.s32.totalorder %s111, %s113
      %p117 = scmp.eq.s32.totalorder %s21, 0
      %p118 = por %p116, %p117
      %p119 = scmp.ne.s32.totalorder %s111, %s113
      %p120 = scmp.eq.s32.totalorder %s26, 1
      %p121 = por %p119, %p120
      %p122 = scmp.ne.s32.totalorder %s113, %s114
      %p123 = scmp.eq.s32.totalorder %s26, 0
      %p124 = por %p122, %p123
      %p125 = scmp.ne.s32.totalorder %s113, %s114
      %p126 = scmp.eq.s32.totalorder %s27, 1
      %p127 = por %p125, %p126
      %p129 = scmp.ne.s32.totalorder %s114, %s128
      %p130 = scmp.eq.s32.totalorder %s27, 0
      %p131 = por %p129, %p130
      %s132 = ssub.s32 %s28, %s40
      %s133 = ssub.s32 %s29, %s36
      %s134 = sor.u32 %s132, %s133
      %p135 = scmp.eq.s32.totalorder %s134, 0
      %s137 = sadd.s32 %s136, 1
      %s138 = scalar_select %p135, %s136, %s137
      %p141 = pneg %p135
      %p142 = scmp.eq.s32.totalorder %s21, 1
      %p143 = por %p141, %p142
      %p144 = scmp.ne.s32.totalorder %s136, %s139
      %p145 = scmp.eq.s32.totalorder %s21, 0
      %p146 = por %p144, %p145
      %p147 = scmp.ne.s32.totalorder %s136, %s139
      %p148 = scmp.eq.s32.totalorder %s26, 1
      %p149 = por %p147, %p148
      %p150 = scmp.ne.s32.totalorder %s139, %s140
      %p151 = scmp.eq.s32.totalorder %s26, 0
      %p152 = por %p150, %p151
      %p153 = scmp.ne.s32.totalorder %s139, %s140
      %p154 = scmp.eq.s32.totalorder %s27, 1
      %p155 = por %p153, %p154
      %p157 = scmp.ne.s32.totalorder %s140, %s156
      %p158 = scmp.eq.s32.totalorder %s27, 0
      %p159 = por %p157, %p158
      %s160 = ssub.s32 %s28, %s40
      %s161 = ssub.s32 %s29, %s36
      %s162 = sor.u32 %s160, %s161
      %p163 = scmp.eq.s32.totalorder %s162, 0
      %s165 = sadd.s32 %s164, 1
      %s166 = scalar_select %p163, %s164, %s165
      %p169 = pneg %p163
      %p170 = scmp.eq.s32.totalorder %s21, 1
      %p171 = por %p169, %p170
      %p172 = scmp.ne.s32.totalorder %s164, %s167
      %p173 = scmp.eq.s32.totalorder %s21, 0
      %p174 = por %p172, %p173
      %p175 = scmp.ne.s32.totalorder %s164, %s167
      %p176 = scmp.eq.s32.totalorder %s26, 1
      %p177 = por %p175, %p176
      %p178 = scmp.ne.s32.totalorder %s167, %s168
      %p179 = scmp.eq.s32.totalorder %s26, 0
      %p180 = por %p178, %p179
      %p181 = scmp.ne.s32.totalorder %s167, %s168
      %p182 = scmp.eq.s32.totalorder %s27, 1
      %p183 = por %p181, %p182
      %p185 = scmp.ne.s32.totalorder %s168, %s184
      %p186 = scmp.eq.s32.totalorder %s27, 0
      %p187 = por %p185, %p186
      %s188 = ssub.s32 %s28, %s40
      %s189 = ssub.s32 %s29, %s36
      %s190 = sor.u32 %s188, %s189
      %p191 = scmp.eq.s32.totalorder %s190, 0
      %s193 = sadd.s32 %s192, 1
      %s194 = scalar_select %p191, %s192, %s193
      %p197 = pneg %p191
      %p198 = scmp.eq.s32.totalorder %s21, 1
      %p199 = por %p197, %p198
      %p200 = scmp.ne.s32.totalorder %s192, %s195
      %p201 = scmp.eq.s32.totalorder %s21, 0
      %p202 = por %p200, %p201
      %p203 = scmp.ne.s32.totalorder %s192, %s195
      %p204 = scmp.eq.s32.totalorder %s26, 1
      %p205 = por %p203, %p204
      %p206 = scmp.ne.s32.totalorder %s195, %s196
      %p207 = scmp.eq.s32.totalorder %s26, 0
      %p208 = por %p206, %p207
      %p209 = scmp.ne.s32.totalorder %s195, %s196
      %p210 = scmp.eq.s32.totalorder %s27, 1
      %p211 = por %p209, %p210
      %p213 = scmp.ne.s32.totalorder %s196, %s212
      %p214 = scmp.eq.s32.totalorder %s27, 0
      %p215 = por %p213, %p214
      %p216 = scmp.le.s32.totalorder 1, %s21
      %p217 = scmp.lt.s32.totalorder %s21, 3
      %p218 = pnand %p216, %p217
      %p219 = pneg %p218
      // Predicated region
      $region9: #{tpu_custom_call.1} parent=5 // pred_check
        _
      $region10: #{tpu_custom_call.1} parent=5 // pred_check_branch
        %221 = sbr.rel (%p218) target = $region12
      $region11: #{tpu_custom_call.1} parent=5 // pred_region
        %s222 = ssub.s32 %s21, 1
        // Predicated region
        $region13: #{tpu_custom_call.1} parent=11 // pred_check
          %p223 = pneg %p82
        $region14: #{tpu_custom_call.1} parent=11 // pred_check_branch
          %225 = sbr.rel (%p223) target = $region16
        $region15: #{tpu_custom_call.1} parent=11 // pred_region
          %s227 = ssub.s32 512, 512
          %228 = vsyncadd [#allocation6], %s227
          %s229 = sshll.u32 [#allocation5], 4
          %s230 = int_to_ptr.vmem [resolvable:$true] %s229
          %235 = dma.hbm_to_vmem [thread:$0]  %s1, 512, %s230, [#allocation6], 64, 64, 4
        $region16: #{tpu_custom_call.1} parent=11 // pred_fallthru
          _
        // Predicated region
        $region17: #{tpu_custom_call.1} parent=11 // pred_check
          %p236 = pneg %p103
        $region18: #{tpu_custom_call.1} parent=11 // pred_check_branch
          %238 = sbr.rel (%p236) target = $region20
        $region19: #{tpu_custom_call.1} parent=11 // pred_region
          %s240 = ssub.s32 512, 512
          %241 = vsyncadd [#allocation6], %s240
          %s242 = sshll.u32 [#allocation7], 4
          %s243 = int_to_ptr.vmem [resolvable:$true] %s242
          %248 = dma.hbm_to_vmem [thread:$0]  %s2, 512, %s243, [#allocation6], 64, 64, 4
        $region20: #{tpu_custom_call.1} parent=11 // pred_fallthru
          _
        // Predicated region
        $region21: #{tpu_custom_call.1} parent=11 // pred_check
          %p249 = pneg %p124
        $region22: #{tpu_custom_call.1} parent=11 // pred_check_branch
          %251 = sbr.rel (%p249) target = $region24
        $region23: #{tpu_custom_call.1} parent=11 // pred_region
          %s253 = ssub.s32 512, 512
          %254 = vsyncadd [#allocation9], %s253
          %s255 = sshll.u32 [#allocation8], 4
          %s256 = int_to_ptr.vmem [resolvable:$true] %s255
          %261 = dma.hbm_to_vmem [thread:$0]  %s3, 512, %s256, [#allocation9], 64, 64, 4
        $region24: #{tpu_custom_call.1} parent=11 // pred_fallthru
          _
      $region12: #{tpu_custom_call.1} parent=5 // pred_fallthru
        _
      %p262 = scmp.lt.s32.totalorder %s21, 2
      // Predicated region
      $region25: #{tpu_custom_call.1} parent=5 // pred_check
        %p263 = pneg %p262
      $region26: #{tpu_custom_call.1} parent=5 // pred_check_branch
        %265 = sbr.rel (%p263) target = $region28
      $region27: #{tpu_custom_call.1} parent=5 // pred_region
        // Predicated region
        $region29: #{tpu_custom_call.1} parent=27 // pred_check
          %p266 = pneg %p55
        $region30: #{tpu_custom_call.1} parent=27 // pred_check_branch
          %268 = sbr.rel (%p266) target = $region32
        $region31: #{tpu_custom_call.1} parent=27 // pred_region
          %s269 = sand.u32 %s45, 1
          %s270 = scalar_lea.sflag [#allocation3], %s269
          %s271 = sand.u32 %s45, 1
          %s272 = smul.addr %s271, 8
          %s273 = scalar_lea.vmem [#allocation2], %s272
          %s274 = smul.u32 2, %s29
          %s276 = ssub.s32 128, 128
          %277 = vsyncadd %s270, %s276
          %s278 = smul.addr %s28, 2
          %s279 = sadd.s32 %s274, %s278
          %s280 = smul.addr %s279, 64
          %s281 = scalar_lea.hbm %s0, %s280
          %s282 = sshll.u32 %s273, 4
          %s283 = int_to_ptr.vmem [resolvable:$true] %s282
          %288 = dma.hbm_to_vmem [thread:$0]  %s281, 128, %s283, %s270, 64, 64, 4
        $region32: #{tpu_custom_call.1} parent=27 // pred_fallthru
          _
      $region28: #{tpu_custom_call.1} parent=5 // pred_fallthru
        _
      %p289 = scmp.le.s32.totalorder 1, %s21
      %p290 = scmp.lt.s32.totalorder %s21, 3
      %p291 = pnand %p289, %p290
      %p292 = pneg %p291
      // Predicated region
      $region33: #{tpu_custom_call.1} parent=5 // pred_check
        _
      $region34: #{tpu_custom_call.1} parent=5 // pred_check_branch
        %294 = sbr.rel (%p291) target = $region36
      $region35: #{tpu_custom_call.1} parent=5 // pred_region
        %s295 = ssub.s32 %s21, 1
        %s296 = sand.u32 %s48, 1
        %s297 = scalar_lea.sflag [#allocation3], %s296
        %s298 = sand.u32 %s48, 1
        %s299 = smul.addr %s298, 8
        %s300 = scalar_lea.vmem [#allocation2], %s299
        // Predicated region
        $region37: #{tpu_custom_call.1} parent=35 // pred_check
          %p301 = pneg %p61
        $region38: #{tpu_custom_call.1} parent=35 // pred_check_branch
          %303 = sbr.rel (%p301) target = $region40
        $region39: #{tpu_custom_call.1} parent=35 // pred_region
          %304 = dma.done %s297, 128
        $region40: #{tpu_custom_call.1} parent=35 // pred_fallthru
          _
        // Predicated region
        $region41: #{tpu_custom_call.1} parent=35 // pred_check
          %p305 = pneg %p82
        $region42: #{tpu_custom_call.1} parent=35 // pred_check_branch
          %307 = sbr.rel (%p305) target = $region44
        $region43: #{tpu_custom_call.1} parent=35 // pred_region
          %308 = dma.done [#allocation6], 512
        $region44: #{tpu_custom_call.1} parent=35 // pred_fallthru
          _
        // Predicated region
        $region45: #{tpu_custom_call.1} parent=35 // pred_check
          %p309 = pneg %p103
        $region46: #{tpu_custom_call.1} parent=35 // pred_check_branch
          %311 = sbr.rel (%p309) target = $region48
        $region47: #{tpu_custom_call.1} parent=35 // pred_region
          %312 = dma.done [#allocation6], 512
        $region48: #{tpu_custom_call.1} parent=35 // pred_fallthru
          _
        // Predicated region
        $region49: #{tpu_custom_call.1} parent=35 // pred_check
          %p313 = pneg %p124
        $region50: #{tpu_custom_call.1} parent=35 // pred_check_branch
          %315 = sbr.rel (%p313) target = $region52
        $region51: #{tpu_custom_call.1} parent=35 // pred_region
          %316 = dma.done [#allocation9], 512
        $region52: #{tpu_custom_call.1} parent=35 // pred_fallthru
          _
        %s317 = sand.u32 %s48, 1
        %s318 = scalar_lea.sflag [#allocation3], %s317
        %s319 = sand.u32 %s48, 1
        %s320 = smul.addr %s319, 8
        %s321 = scalar_lea.vmem [#allocation2], %s320
        %p322 = pneg %p61
        %p323 = pneg %p58
        %p324 = pneg %p82
        %p325 = pneg %p79
        %p326 = pneg %p103
        %p327 = pneg %p100
        %p328 = pneg %p124
        %p329 = pneg %p121
        %p330 = pneg %p152
        %p331 = pneg %p149
        %s332 = smul.u32 2, %s31
        %p333 = scmp.lt.s32.totalorder %s30, 1
        %s334 = scalar_select %p333, %s30, 1
        %p335 = scmp.lt.s32.totalorder %s332, 1
        %s336 = scalar_select %p335, %s332, 1
        %s337 = smul.addr %s334, 16
        %s338 = sadd.s32 %s336, %s337
        %s339 = smul.addr %s338, 4
        %s340 = scalar_lea.vmem %s4, %s339
        %p341 = pneg %p180
        %p342 = pneg %p177
        %s343 = sand.u32 %s167, 1
        %s344 = scalar_lea.sflag [#allocation4], %s343
        %s345 = sand.u32 %s167, 1
        %s346 = smul.addr %s345, 32
        %s347 = scalar_lea.vmem [#allocation10], %s346
        %p348 = pneg %p208
        %p349 = pneg %p205
        %s350 = smul.u32 2, %s31
        %p351 = scmp.lt.s32.totalorder %s30, 1
        %s352 = scalar_select %p351, %s30, 1
        %p353 = scmp.lt.s32.totalorder %s350, 1
        %s354 = scalar_select %p353, %s350, 1
        %s355 = smul.addr %s352, 16
        %s356 = sadd.s32 %s354, %s355
        %s357 = smul.addr %s356, 4
        %s358 = scalar_lea.vmem %s6, %s357
        %s359 = smul.u32 2, %s31
        %s360 = smul.u32 2, %s31
        %p361 = scmp.lt.s32.totalorder %s30, 1
        %s362 = scalar_select %p361, %s30, 1
        %p363 = scmp.lt.s32.totalorder %s360, 1
        %s364 = scalar_select %p363, %s360, 1
        %s365 = smul.addr %s362, 16
        %s366 = sadd.s32 %s364, %s365
        %s367 = smul.addr %s366, 4
        %s368 = scalar_lea.vmem %s4, %s367
        %s369 = smul.u32 2, %s31
        %s370 = smul.u32 2, %s31
        %p371 = scmp.lt.s32.totalorder %s30, 1
        %s372 = scalar_select %p371, %s30, 1
        %p373 = scmp.lt.s32.totalorder %s370, 1
        %s374 = scalar_select %p373, %s370, 1
        %s375 = smul.addr %s372, 16
        %s376 = sadd.s32 %s374, %s375
        %s377 = smul.addr %s376, 4
        %s378 = scalar_lea.vmem %s6, %s377
        %s379 = smul.u32 2, %s31
        %v381 = vld [vmem:[%s300] sm:$0xf]
        %v382 = vld [vmem:[%s300 + $0x4] sm:$0xf]
        %v383 = vld [vmem:[#allocation5] sm:$0xf]
        %v384 = vld [vmem:[#allocation5 + $0x4] sm:$0xf]
        %v385 = vld [vmem:[#allocation5 + $0x8] sm:$0xf]
        %v386 = vld [vmem:[#allocation5 + $0xc] sm:$0xf]
        %v387 = vld [vmem:[#allocation5 + $0x10] sm:$0xf]
        %v388 = vld [vmem:[#allocation5 + $0x14] sm:$0xf]
        %v389 = vld [vmem:[#allocation5 + $0x18] sm:$0xf]
        %v390 = vld [vmem:[#allocation5 + $0x1c] sm:$0xf]
        %v393 = vunpack.c.l.b16 %v381
        %v394 = vunpack.c.l.b16 %v382
        %v395 = vpack.c.b16 %v394, %v393
        %v404 = vunpack.c.l.b16 %v383
        %v405 = vunpack.c.l.b16 %v384
        %v406 = vunpack.c.l.b16 %v385
        %v407 = vunpack.c.l.b16 %v386
        %v408 = vunpack.c.l.b16 %v387
        %v409 = vunpack.c.l.b16 %v388
        %v410 = vunpack.c.l.b16 %v389
        %v411 = vunpack.c.l.b16 %v390
        %v412 = vpack.c.b16 %v405, %v404
        %v413 = vpack.c.b16 %v407, %v406
        %v414 = vpack.c.b16 %v409, %v408
        %v415 = vpack.c.b16 %v411, %v410
        %vm420 = vcmask 523264
        %v422 = vsel %vm420, %v395, 0
        %424 = vmatprep.subr.bf16.mxu0 0
        %425 = vmatpush1.bf16.msra.mxu0 %v412
        %426 = vmatprep.subr.bf16.mxu0 0
        %427 = vmatpush1.bf16.msra.mxu0 %v413
        %428 = vmatprep.subr.bf16.mxu0 0
        %429 = vmatpush1.bf16.msra.mxu0 %v414
        %430 = vmatprep.subr.bf16.mxu0 0
        %431 = vmatpush1.bf16.msra.mxu0 %v415
        %432 = vmatprep.subr.bf16.mxu0 0
        %433 = vmatpush1.bf16.msra.mxu0 0
        %434 = vmatprep.subr.bf16.mxu0 0
        %435 = vmatpush1.bf16.msra.mxu0 0
        %436 = vmatprep.subr.bf16.mxu0 0
        %437 = vmatpush1.bf16.msra.mxu0 0
        %438 = vmatprep.subr.bf16.mxu0 0
        %439 = vmatpush1.bf16.msra.mxu0 0
        %440 = vmatprep.subr.bf16.mxu0 0
        %441 = vmatpush1.bf16.msra.mxu0 0
        %442 = vmatprep.subr.bf16.mxu0 0
        %443 = vmatpush1.bf16.msra.mxu0 0
        %444 = vmatprep.subr.bf16.mxu0 0
        %445 = vmatpush1.bf16.msra.mxu0 0
        %446 = vmatprep.subr.bf16.mxu0 0
        %447 = vmatpush1.bf16.msra.mxu0 0
        %448 = vmatprep.subr.bf16.mxu0 0
        %449 = vmatpush1.bf16.msra.mxu0 0
        %450 = vmatprep.subr.bf16.mxu0 0
        %451 = vmatpush1.bf16.msra.mxu0 0
        %452 = vmatprep.subr.bf16.mxu0 0
        %453 = vmatpush1.bf16.msra.mxu0 0
        %454 = vmatprep.subr.bf16.mxu0 0
        %455 = vmatpush1.bf16.msra.mxu0 0
        %456 = vmatprep.mubr.bf16.mxu0 0
        %457 = vmatmul.mubr.bf16.gmra.mrb[0].mxu0 %v422
        %v458 = vpop.f32.mrb[0].mxu0
        %v459 = vadd.f32 0.0, %v458
        %v460 = vpop.f32.mrb[0].mxu0
        %v461 = vpop.f32.mrb[0].mxu0
        %v462 = vadd.f32 0.0, %v461
        %v463 = vpop.f32.mrb[0].mxu0
        %464 = vdwg.mxu0
        %v465 = vld [vmem:[#allocation7] sm:$0xf]
        %v466 = vld [vmem:[#allocation7 + $0x4] sm:$0xf]
        %v467 = vld [vmem:[#allocation7 + $0x8] sm:$0xf]
        %v468 = vld [vmem:[#allocation7 + $0xc] sm:$0xf]
        %v469 = vld [vmem:[#allocation7 + $0x10] sm:$0xf]
        %v470 = vld [vmem:[#allocation7 + $0x14] sm:$0xf]
        %v471 = vld [vmem:[#allocation7 + $0x18] sm:$0xf]
        %v472 = vld [vmem:[#allocation7 + $0x1c] sm:$0xf]
        %v481 = vunpack.c.l.b16 %v465
        %v482 = vunpack.c.l.b16 %v466
        %v483 = vunpack.c.l.b16 %v467
        %v484 = vunpack.c.l.b16 %v468
        %v485 = vunpack.c.l.b16 %v469
        %v486 = vunpack.c.l.b16 %v470
        %v487 = vunpack.c.l.b16 %v471
        %v488 = vunpack.c.l.b16 %v472
        %v489 = vpack.c.b16 %v482, %v481
        %v490 = vpack.c.b16 %v484, %v483
        %v491 = vpack.c.b16 %v486, %v485
        %v492 = vpack.c.b16 %v488, %v487
        %497 = vmatprep.subr.bf16.mxu0 0
        %498 = vmatpush1.bf16.msra.mxu0 %v489
        %499 = vmatprep.subr.bf16.mxu0 0
        %500 = vmatpush1.bf16.msra.mxu0 %v490
        %501 = vmatprep.subr.bf16.mxu0 0
        %502 = vmatpush1.bf16.msra.mxu0 %v491
        %503 = vmatprep.subr.bf16.mxu0 0
        %504 = vmatpush1.bf16.msra.mxu0 %v492
        %505 = vmatprep.subr.bf16.mxu0 0
        %506 = vmatpush1.bf16.msra.mxu0 0
        %507 = vmatprep.subr.bf16.mxu0 0
        %508 = vmatpush1.bf16.msra.mxu0 0
        %509 = vmatprep.subr.bf16.mxu0 0
        %510 = vmatpush1.bf16.msra.mxu0 0
        %511 = vmatprep.subr.bf16.mxu0 0
        %512 = vmatpush1.bf16.msra.mxu0 0
        %513 = vmatprep.subr.bf16.mxu0 0
        %514 = vmatpush1.bf16.msra.mxu0 0
        %515 = vmatprep.subr.bf16.mxu0 0
        %516 = vmatpush1.bf16.msra.mxu0 0
        %517 = vmatprep.subr.bf16.mxu0 0
        %518 = vmatpush1.bf16.msra.mxu0 0
        %519 = vmatprep.subr.bf16.mxu0 0
        %520 = vmatpush1.bf16.msra.mxu0 0
        %521 = vmatprep.subr.bf16.mxu0 0
        %522 = vmatpush1.bf16.msra.mxu0 0
        %523 = vmatprep.subr.bf16.mxu0 0
        %524 = vmatpush1.bf16.msra.mxu0 0
        %525 = vmatprep.subr.bf16.mxu0 0
        %526 = vmatpush1.bf16.msra.mxu0 0
        %527 = vmatprep.subr.bf16.mxu0 0
        %528 = vmatpush1.bf16.msra.mxu0 0
        %529 = vmatprep.mubr.bf16.mxu0 0
        %530 = vmatmul.mubr.bf16.gmra.mrb[0].mxu0 %v422
        %v531 = vpop.f32.mrb[0].mxu0
        %v532 = vadd.f32 0.0, %v531
        %v533 = vpop.f32.mrb[0].mxu0
        %v534 = vpop.f32.mrb[0].mxu0
        %v535 = vadd.f32 0.0, %v534
        %v536 = vpop.f32.mrb[0].mxu0
        %537 = vdwg.mxu0
        %v538 = vld [vmem:[#allocation8] sm:$0xf]
        %v539 = vld [vmem:[#allocation8 + $0x4] sm:$0xf]
        %v540 = vld [vmem:[#allocation8 + $0x8] sm:$0xf]
        %v541 = vld [vmem:[#allocation8 + $0xc] sm:$0xf]
        %v542 = vld [vmem:[#allocation8 + $0x10] sm:$0xf]
        %v543 = vld [vmem:[#allocation8 + $0x14] sm:$0xf]
        %v544 = vld [vmem:[#allocation8 + $0x18] sm:$0xf]
        %v545 = vld [vmem:[#allocation8 + $0x1c] sm:$0xf]
        %v554 = vunpack.c.l.b16 %v538
        %v555 = vunpack.c.l.b16 %v539
        %v556 = vunpack.c.l.b16 %v540
        %v557 = vunpack.c.l.b16 %v541
        %v558 = vunpack.c.l.b16 %v542
        %v559 = vunpack.c.l.b16 %v543
        %v560 = vunpack.c.l.b16 %v544
        %v561 = vunpack.c.l.b16 %v545
        %v562 = vpack.c.b16 %v555, %v554
        %v563 = vpack.c.b16 %v557, %v556
        %v564 = vpack.c.b16 %v559, %v558
        %v565 = vpack.c.b16 %v561, %v560
        %570 = vmatprep.subr.bf16.mxu0 0
        %571 = vmatpush1.bf16.msra.mxu0 %v562
        %572 = vmatprep.subr.bf16.mxu0 0
        %573 = vmatpush1.bf16.msra.mxu0 %v563
        %574 = vmatprep.subr.bf16.mxu0 0
        %575 = vmatpush1.bf16.msra.mxu0 %v564
        %576 = vmatprep.subr.bf16.mxu0 0
        %577 = vmatpush1.bf16.msra.mxu0 %v565
        %578 = vmatprep.subr.bf16.mxu0 0
        %579 = vmatpush1.bf16.msra.mxu0 0
        %580 = vmatprep.subr.bf16.mxu0 0
        %581 = vmatpush1.bf16.msra.mxu0 0
        %582 = vmatprep.subr.bf16.mxu0 0
        %583 = vmatpush1.bf16.msra.mxu0 0
        %584 = vmatprep.subr.bf16.mxu0 0
        %585 = vmatpush1.bf16.msra.mxu0 0
        %586 = vmatprep.subr.bf16.mxu0 0
        %587 = vmatpush1.bf16.msra.mxu0 0
        %588 = vmatprep.subr.bf16.mxu0 0
        %589 = vmatpush1.bf16.msra.mxu0 0
        %590 = vmatprep.subr.bf16.mxu0 0
        %591 = vmatpush1.bf16.msra.mxu0 0
        %592 = vmatprep.subr.bf16.mxu0 0
        %593 = vmatpush1.bf16.msra.mxu0 0
        %594 = vmatprep.subr.bf16.mxu0 0
        %595 = vmatpush1.bf16.msra.mxu0 0
        %596 = vmatprep.subr.bf16.mxu0 0
        %597 = vmatpush1.bf16.msra.mxu0 0
        %598 = vmatprep.subr.bf16.mxu0 0
        %599 = vmatpush1.bf16.msra.mxu0 0
        %600 = vmatprep.subr.bf16.mxu0 0
        %601 = vmatpush1.bf16.msra.mxu0 0
        %602 = vmatprep.mubr.bf16.mxu0 0
        %603 = vmatmul.mubr.bf16.gmra.mrb[0].mxu0 %v422
        %v604 = vpop.f32.mrb[0].mxu0
        %v605 = vadd.f32 0.0, %v604
        %v606 = vpop.f32.mrb[0].mxu0
        %v607 = vpop.f32.mrb[0].mxu0
        %v608 = vadd.f32 0.0, %v607
        %v609 = vpop.f32.mrb[0].mxu0
        %610 = vdwg.mxu0
        %v611 = vpack.c.bf16 %v462, %v459
        %v613 = vunpack.c.l.b16 %v611
        %v614 = vunpack.c.h.b16 %v611
        %v615 = vpack.c.b16 %v613, %v613
        %v616 = vpack.c.b16 %v614, %v614
        %vm619 = vcmask 60416
        %620 = vst.msk [vmem:[%s368] sm:$0xf] %vm619, %v615
        %621 = vst.msk [vmem:[%s368 + $0x4] sm:$0xf] %vm619, %v616
        %622 = vxpose.xlu0.b32.start [1/16] %v532, 128
        %623 = vxpose.xlu0.b32.cont [2/16] %v535, 128
        %624 = vxpose.xlu0.b32.cont [3/16] 0.0, 128
        %625 = vxpose.xlu0.b32.cont [4/16] 0.0, 128
        %626 = vxpose.xlu0.b32.cont [5/16] 0.0, 128
        %627 = vxpose.xlu0.b32.cont [6/16] 0.0, 128
        %628 = vxpose.xlu0.b32.cont [7/16] 0.0, 128
        %629 = vxpose.xlu0.b32.cont [8/16] 0.0, 128
        %630 = vxpose.xlu0.b32.cont [9/16] 0.0, 128
        %631 = vxpose.xlu0.b32.cont [10/16] 0.0, 128
        %632 = vxpose.xlu0.b32.cont [11/16] 0.0, 128
        %633 = vxpose.xlu0.b32.cont [12/16] 0.0, 128
        %634 = vxpose.xlu0.b32.cont [13/16] 0.0, 128
        %635 = vxpose.xlu0.b32.cont [14/16] 0.0, 128
        %636 = vxpose.xlu0.b32.cont [15/16] 0.0, 128
        %637 = vxpose.xlu0.b32.end [16/16] 0.0, 128
        %v638 = vpop.trf.xlu0
        %v639 = vpop.trf.xlu0
        %v640 = vpop.trf.xlu0
        %v641 = vpop.trf.xlu0
        %v642 = vpop.trf.xlu0
        %v643 = vpop.trf.xlu0
        %v644 = vpop.trf.xlu0
        %v645 = vpop.trf.xlu0
        %v646 = vpop.trf.xlu0
        %v647 = vpop.trf.xlu0
        %v648 = vpop.trf.xlu0
        %v649 = vpop.trf.xlu0
        %v650 = vpop.trf.xlu0
        %v651 = vpop.trf.xlu0
        %v652 = vpop.trf.xlu0
        %v653 = vpop.trf.xlu0
        %v654 = vpack.c.bf16 %v638, %v638
        %vm655 = vcmask 125952
        %656 = vst.msk [vmem:[%s347] sm:$0xf] %vm655, %v654
        %v657 = vpack.c.bf16 %v608, %v605
        %v659 = vunpack.c.l.b16 %v657
        %v660 = vunpack.c.h.b16 %v657
        %v661 = vpack.c.b16 %v659, %v659
        %v662 = vpack.c.b16 %v660, %v660
        %665 = vst.msk [vmem:[%s378] sm:$0xf] %vm619, %v661
        %666 = vst.msk [vmem:[%s378 + $0x4] sm:$0xf] %vm619, %v662
        %667 = vrot.lane.b32.xlu0 %v615, 120
        %v668 = vpop.permute.xlu0 %667
        %669 = vrot.lane.b32.xlu0 %v616, 120
        %v670 = vpop.permute.xlu0 %669
        %s673 = scalar_lea.vmem %s368, 8
        %674 = vst.msk [vmem:[%s673] sm:$0xf] %vm619, %v668
        %675 = vst.msk [vmem:[%s673 + $0x4] sm:$0xf] %vm619, %v670
        %678 = vrot.lane.b32.xlu0 %v532, 120
        %v679 = vpop.permute.xlu0 %678
        %680 = vrot.lane.b32.xlu0 %v535, 120
        %v681 = vpop.permute.xlu0 %680
        %684 = vxpose.xlu0.b32.start [1/16] %v679, 128
        %685 = vxpose.xlu0.b32.cont [2/16] %v681, 128
        %686 = vxpose.xlu0.b32.cont [3/16] 0.0, 128
        %687 = vxpose.xlu0.b32.cont [4/16] 0.0, 128
        %688 = vxpose.xlu0.b32.cont [5/16] 0.0, 128
        %689 = vxpose.xlu0.b32.cont [6/16] 0.0, 128
        %690 = vxpose.xlu0.b32.cont [7/16] 0.0, 128
        %691 = vxpose.xlu0.b32.cont [8/16] 0.0, 128
        %692 = vxpose.xlu0.b32.cont [9/16] 0.0, 128
        %693 = vxpose.xlu0.b32.cont [10/16] 0.0, 128
        %694 = vxpose.xlu0.b32.cont [11/16] 0.0, 128
        %695 = vxpose.xlu0.b32.cont [12/16] 0.0, 128
        %696 = vxpose.xlu0.b32.cont [13/16] 0.0, 128
        %697 = vxpose.xlu0.b32.cont [14/16] 0.0, 128
        %698 = vxpose.xlu0.b32.cont [15/16] 0.0, 128
        %699 = vxpose.xlu0.b32.end [16/16] 0.0, 128
        %v700 = vpop.trf.xlu0
        %v701 = vpop.trf.xlu0
        %v702 = vpop.trf.xlu0
        %v703 = vpop.trf.xlu0
        %v704 = vpop.trf.xlu0
        %v705 = vpop.trf.xlu0
        %v706 = vpop.trf.xlu0
        %v707 = vpop.trf.xlu0
        %v708 = vpop.trf.xlu0
        %v709 = vpop.trf.xlu0
        %v710 = vpop.trf.xlu0
        %v711 = vpop.trf.xlu0
        %v712 = vpop.trf.xlu0
        %v713 = vpop.trf.xlu0
        %v714 = vpop.trf.xlu0
        %v715 = vpop.trf.xlu0
        %v716 = vpack.c.bf16 %v700, %v700
        %s717 = scalar_lea.vmem %s347, 4 [#allocation10]
        %718 = vst.msk [vmem:[%s717] sm:$0xf] %vm655, %v716
        %719 = vrot.lane.b32.xlu0 %v661, 120
        %v720 = vpop.permute.xlu0 %719
        %721 = vrot.lane.b32.xlu0 %v662, 120
        %v722 = vpop.permute.xlu0 %721
        %s725 = scalar_lea.vmem %s378, 8
        %726 = vst.msk [vmem:[%s725] sm:$0xf] %vm619, %v720
        %727 = vst.msk [vmem:[%s725 + $0x4] sm:$0xf] %vm619, %v722
        %728 = vrot.lane.b32.xlu0 %v615, 112
        %v729 = vpop.permute.xlu0 %728
        %730 = vrot.lane.b32.xlu0 %v616, 112
        %v731 = vpop.permute.xlu0 %730
        %s734 = scalar_lea.vmem %s368, 16
        %735 = vst.msk [vmem:[%s734] sm:$0xf] %vm619, %v729
        %736 = vst.msk [vmem:[%s734 + $0x4] sm:$0xf] %vm619, %v731
        %737 = vrot.lane.b32.xlu0 %v532, 112
        %v738 = vpop.permute.xlu0 %737
        %739 = vrot.lane.b32.xlu0 %v535, 112
        %v740 = vpop.permute.xlu0 %739
        %743 = vxpose.xlu0.b32.start [1/16] %v738, 128
        %744 = vxpose.xlu0.b32.cont [2/16] %v740, 128
        %745 = vxpose.xlu0.b32.cont [3/16] 0.0, 128
        %746 = vxpose.xlu0.b32.cont [4/16] 0.0, 128
        %747 = vxpose.xlu0.b32.cont [5/16] 0.0, 128
        %748 = vxpose.xlu0.b32.cont [6/16] 0.0, 128
        %749 = vxpose.xlu0.b32.cont [7/16] 0.0, 128
        %750 = vxpose.xlu0.b32.cont [8/16] 0.0, 128
        %751 = vxpose.xlu0.b32.cont [9/16] 0.0, 128
        %752 = vxpose.xlu0.b32.cont [10/16] 0.0, 128
        %753 = vxpose.xlu0.b32.cont [11/16] 0.0, 128
        %754 = vxpose.xlu0.b32.cont [12/16] 0.0, 128
        %755 = vxpose.xlu0.b32.cont [13/16] 0.0, 128
        %756 = vxpose.xlu0.b32.cont [14/16] 0.0, 128
        %757 = vxpose.xlu0.b32.cont [15/16] 0.0, 128
        %758 = vxpose.xlu0.b32.end [16/16] 0.0, 128
        %v759 = vpop.trf.xlu0
        %v760 = vpop.trf.xlu0
        %v761 = vpop.trf.xlu0
        %v762 = vpop.trf.xlu0
        %v763 = vpop.trf.xlu0
        %v764 = vpop.trf.xlu0
        %v765 = vpop.trf.xlu0
        %v766 = vpop.trf.xlu0
        %v767 = vpop.trf.xlu0
        %v768 = vpop.trf.xlu0
        %v769 = vpop.trf.xlu0
        %v770 = vpop.trf.xlu0
        %v771 = vpop.trf.xlu0
        %v772 = vpop.trf.xlu0
        %v773 = vpop.trf.xlu0
        %v774 = vpop.trf.xlu0
        %v775 = vpack.c.bf16 %v759, %v759
        %s776 = scalar_lea.vmem %s347, 8 [#allocation10]
        %777 = vst.msk [vmem:[%s776] sm:$0xf] %vm655, %v775
        %778 = vrot.lane.b32.xlu0 %v661, 112
        %v779 = vpop.permute.xlu0 %778
        %780 = vrot.lane.b32.xlu0 %v662, 112
        %v781 = vpop.permute.xlu0 %780
        %s784 = scalar_lea.vmem %s378, 16
        %785 = vst.msk [vmem:[%s784] sm:$0xf] %vm619, %v779
        %786 = vst.msk [vmem:[%s784 + $0x4] sm:$0xf] %vm619, %v781
        %787 = vrot.lane.b32.xlu0 %v615, 104
        %v788 = vpop.permute.xlu0 %787
        %789 = vrot.lane.b32.xlu0 %v616, 104
        %v790 = vpop.permute.xlu0 %789
        %s793 = scalar_lea.vmem %s368, 24
        %794 = vst.msk [vmem:[%s793] sm:$0xf] %vm619, %v788
        %795 = vst.msk [vmem:[%s793 + $0x4] sm:$0xf] %vm619, %v790
        %796 = vrot.lane.b32.xlu0 %v532, 104
        %v797 = vpop.permute.xlu0 %796
        %798 = vrot.lane.b32.xlu0 %v535, 104
        %v799 = vpop.permute.xlu0 %798
        %802 = vxpose.xlu0.b32.start [1/16] %v797, 128
        %803 = vxpose.xlu0.b32.cont [2/16] %v799, 128
        %804 = vxpose.xlu0.b32.cont [3/16] 0.0, 128
        %805 = vxpose.xlu0.b32.cont [4/16] 0.0, 128
        %806 = vxpose.xlu0.b32.cont [5/16] 0.0, 128
        %807 = vxpose.xlu0.b32.cont [6/16] 0.0, 128
        %808 = vxpose.xlu0.b32.cont [7/16] 0.0, 128
        %809 = vxpose.xlu0.b32.cont [8/16] 0.0, 128
        %810 = vxpose.xlu0.b32.cont [9/16] 0.0, 128
        %811 = vxpose.xlu0.b32.cont [10/16] 0.0, 128
        %812 = vxpose.xlu0.b32.cont [11/16] 0.0, 128
        %813 = vxpose.xlu0.b32.cont [12/16] 0.0, 128
        %814 = vxpose.xlu0.b32.cont [13/16] 0.0, 128
        %815 = vxpose.xlu0.b32.cont [14/16] 0.0, 128
        %816 = vxpose.xlu0.b32.cont [15/16] 0.0, 128
        %817 = vxpose.xlu0.b32.end [16/16] 0.0, 128
        %v818 = vpop.trf.xlu0
        %v819 = vpop.trf.xlu0
        %v820 = vpop.trf.xlu0
        %v821 = vpop.trf.xlu0
        %v822 = vpop.trf.xlu0
        %v823 = vpop.trf.xlu0
        %v824 = vpop.trf.xlu0
        %v825 = vpop.trf.xlu0
        %v826 = vpop.trf.xlu0
        %v827 = vpop.trf.xlu0
        %v828 = vpop.trf.xlu0
        %v829 = vpop.trf.xlu0
        %v830 = vpop.trf.xlu0
        %v831 = vpop.trf.xlu0
        %v832 = vpop.trf.xlu0
        %v833 = vpop.trf.xlu0
        %v834 = vpack.c.bf16 %v818, %v818
        %s835 = scalar_lea.vmem %s347, 12 [#allocation10]
        %836 = vst.msk [vmem:[%s835] sm:$0xf] %vm655, %v834
        %837 = vrot.lane.b32.xlu0 %v661, 104
        %v838 = vpop.permute.xlu0 %837
        %839 = vrot.lane.b32.xlu0 %v662, 104
        %v840 = vpop.permute.xlu0 %839
        %s843 = scalar_lea.vmem %s378, 24
        %844 = vst.msk [vmem:[%s843] sm:$0xf] %vm619, %v838
        %845 = vst.msk [vmem:[%s843 + $0x4] sm:$0xf] %vm619, %v840
        %846 = vrot.lane.b32.xlu0 %v615, 96
        %v847 = vpop.permute.xlu0 %846
        %848 = vrot.lane.b32.xlu0 %v616, 96
        %v849 = vpop.permute.xlu0 %848
        %s852 = scalar_lea.vmem %s368, 32
        %853 = vst.msk [vmem:[%s852] sm:$0xf] %vm619, %v847
        %854 = vst.msk [vmem:[%s852 + $0x4] sm:$0xf] %vm619, %v849
        %855 = vrot.lane.b32.xlu0 %v532, 96
        %v856 = vpop.permute.xlu0 %855
        %857 = vrot.lane.b32.xlu0 %v535, 96
        %v858 = vpop.permute.xlu0 %857
        %861 = vxpose.xlu0.b32.start [1/16] %v856, 128
        %862 = vxpose.xlu0.b32.cont [2/16] %v858, 128
        %863 = vxpose.xlu0.b32.cont [3/16] 0.0, 128
        %864 = vxpose.xlu0.b32.cont [4/16] 0.0, 128
        %865 = vxpose.xlu0.b32.cont [5/16] 0.0, 128
        %866 = vxpose.xlu0.b32.cont [6/16] 0.0, 128
        %867 = vxpose.xlu0.b32.cont [7/16] 0.0, 128
        %868 = vxpose.xlu0.b32.cont [8/16] 0.0, 128
        %869 = vxpose.xlu0.b32.cont [9/16] 0.0, 128
        %870 = vxpose.xlu0.b32.cont [10/16] 0.0, 128
        %871 = vxpose.xlu0.b32.cont [11/16] 0.0, 128
        %872 = vxpose.xlu0.b32.cont [12/16] 0.0, 128
        %873 = vxpose.xlu0.b32.cont [13/16] 0.0, 128
        %874 = vxpose.xlu0.b32.cont [14/16] 0.0, 128
        %875 = vxpose.xlu0.b32.cont [15/16] 0.0, 128
        %876 = vxpose.xlu0.b32.end [16/16] 0.0, 128
        %v877 = vpop.trf.xlu0
        %v878 = vpop.trf.xlu0
        %v879 = vpop.trf.xlu0
        %v880 = vpop.trf.xlu0
        %v881 = vpop.trf.xlu0
        %v882 = vpop.trf.xlu0
        %v883 = vpop.trf.xlu0
        %v884 = vpop.trf.xlu0
        %v885 = vpop.trf.xlu0
        %v886 = vpop.trf.xlu0
        %v887 = vpop.trf.xlu0
        %v888 = vpop.trf.xlu0
        %v889 = vpop.trf.xlu0
        %v890 = vpop.trf.xlu0
        %v891 = vpop.trf.xlu0
        %v892 = vpop.trf.xlu0
        %v893 = vpack.c.bf16 %v877, %v877
        %s894 = scalar_lea.vmem %s347, 16 [#allocation10]
        %895 = vst.msk [vmem:[%s894] sm:$0xf] %vm655, %v893
        %896 = vrot.lane.b32.xlu0 %v661, 96
        %v897 = vpop.permute.xlu0 %896
        %898 = vrot.lane.b32.xlu0 %v662, 96
        %v899 = vpop.permute.xlu0 %898
        %s902 = scalar_lea.vmem %s378, 32
        %903 = vst.msk [vmem:[%s902] sm:$0xf] %vm619, %v897
        %904 = vst.msk [vmem:[%s902 + $0x4] sm:$0xf] %vm619, %v899
        %905 = vrot.lane.b32.xlu0 %v615, 88
        %v906 = vpop.permute.xlu0 %905
        %907 = vrot.lane.b32.xlu0 %v616, 88
        %v908 = vpop.permute.xlu0 %907
        %s911 = scalar_lea.vmem %s368, 40
        %912 = vst.msk [vmem:[%s911] sm:$0xf] %vm619, %v906
        %913 = vst.msk [vmem:[%s911 + $0x4] sm:$0xf] %vm619, %v908
        %914 = vrot.lane.b32.xlu0 %v532, 88
        %v915 = vpop.permute.xlu0 %914
        %916 = vrot.lane.b32.xlu0 %v535, 88
        %v917 = vpop.permute.xlu0 %916
        %920 = vxpose.xlu0.b32.start [1/16] %v915, 128
        %921 = vxpose.xlu0.b32.cont [2/16] %v917, 128
        %922 = vxpose.xlu0.b32.cont [3/16] 0.0, 128
        %923 = vxpose.xlu0.b32.cont [4/16] 0.0, 128
        %924 = vxpose.xlu0.b32.cont [5/16] 0.0, 128
        %925 = vxpose.xlu0.b32.cont [6/16] 0.0, 128
        %926 = vxpose.xlu0.b32.cont [7/16] 0.0, 128
        %927 = vxpose.xlu0.b32.cont [8/16] 0.0, 128
        %928 = vxpose.xlu0.b32.cont [9/16] 0.0, 128
        %929 = vxpose.xlu0.b32.cont [10/16] 0.0, 128
        %930 = vxpose.xlu0.b32.cont [11/16] 0.0, 128
        %931 = vxpose.xlu0.b32.cont [12/16] 0.0, 128
        %932 = vxpose.xlu0.b32.cont [13/16] 0.0, 128
        %933 = vxpose.xlu0.b32.cont [14/16] 0.0, 128
        %934 = vxpose.xlu0.b32.cont [15/16] 0.0, 128
        %935 = vxpose.xlu0.b32.end [16/16] 0.0, 128
        %v936 = vpop.trf.xlu0
        %v937 = vpop.trf.xlu0
        %v938 = vpop.trf.xlu0
        %v939 = vpop.trf.xlu0
        %v940 = vpop.trf.xlu0
        %v941 = vpop.trf.xlu0
        %v942 = vpop.trf.xlu0
        %v943 = vpop.trf.xlu0
        %v944 = vpop.trf.xlu0
        %v945 = vpop.trf.xlu0
        %v946 = vpop.trf.xlu0
        %v947 = vpop.trf.xlu0
        %v948 = vpop.trf.xlu0
        %v949 = vpop.trf.xlu0
        %v950 = vpop.trf.xlu0
        %v951 = vpop.trf.xlu0
        %v952 = vpack.c.bf16 %v936, %v936
        %s953 = scalar_lea.vmem %s347, 20 [#allocation10]
        %954 = vst.msk [vmem:[%s953] sm:$0xf] %vm655, %v952
        %955 = vrot.lane.b32.xlu0 %v661, 88
        %v956 = vpop.permute.xlu0 %955
        %957 = vrot.lane.b32.xlu0 %v662, 88
        %v958 = vpop.permute.xlu0 %957
        %s961 = scalar_lea.vmem %s378, 40
        %962 = vst.msk [vmem:[%s961] sm:$0xf] %vm619, %v956
        %963 = vst.msk [vmem:[%s961 + $0x4] sm:$0xf] %vm619, %v958
        %964 = vrot.lane.b32.xlu0 %v615, 80
        %v965 = vpop.permute.xlu0 %964
        %966 = vrot.lane.b32.xlu0 %v616, 80
        %v967 = vpop.permute.xlu0 %966
        %s970 = scalar_lea.vmem %s368, 48
        %971 = vst.msk [vmem:[%s970] sm:$0xf] %vm619, %v965
        %972 = vst.msk [vmem:[%s970 + $0x4] sm:$0xf] %vm619, %v967
        %973 = vrot.lane.b32.xlu0 %v532, 80
        %v974 = vpop.permute.xlu0 %973
        %975 = vrot.lane.b32.xlu0 %v535, 80
        %v976 = vpop.permute.xlu0 %975
        %979 = vxpose.xlu0.b32.start [1/16] %v974, 128
        %980 = vxpose.xlu0.b32.cont [2/16] %v976, 128
        %981 = vxpose.xlu0.b32.cont [3/16] 0.0, 128
        %982 = vxpose.xlu0.b32.cont [4/16] 0.0, 128
        %983 = vxpose.xlu0.b32.cont [5/16] 0.0, 128
        %984 = vxpose.xlu0.b32.cont [6/16] 0.0, 128
        %985 = vxpose.xlu0.b32.cont [7/16] 0.0, 128
        %986 = vxpose.xlu0.b32.cont [8/16] 0.0, 128
        %987 = vxpose.xlu0.b32.cont [9/16] 0.0, 128
        %988 = vxpose.xlu0.b32.cont [10/16] 0.0, 128
        %989 = vxpose.xlu0.b32.cont [11/16] 0.0, 128
        %990 = vxpose.xlu0.b32.cont [12/16] 0.0, 128
        %991 = vxpose.xlu0.b32.cont [13/16] 0.0, 128
        %992 = vxpose.xlu0.b32.cont [14/16] 0.0, 128
        %993 = vxpose.xlu0.b32.cont [15/16] 0.0, 128
        %994 = vxpose.xlu0.b32.end [16/16] 0.0, 128
        %v995 = vpop.trf.xlu0
        %v996 = vpop.trf.xlu0
        %v997 = vpop.trf.xlu0
        %v998 = vpop.trf.xlu0
        %v999 = vpop.trf.xlu0
        %v1000 = vpop.trf.xlu0
        %v1001 = vpop.trf.xlu0
        %v1002 = vpop.trf.xlu0
        %v1003 = vpop.trf.xlu0
        %v1004 = vpop.trf.xlu0
        %v1005 = vpop.trf.xlu0
        %v1006 = vpop.trf.xlu0
        %v1007 = vpop.trf.xlu0
        %v1008 = vpop.trf.xlu0
        %v1009 = vpop.trf.xlu0
        %v1010 = vpop.trf.xlu0
        %v1011 = vpack.c.bf16 %v995, %v995
        %s1012 = scalar_lea.vmem %s347, 24 [#allocation10]
        %1013 = vst.msk [vmem:[%s1012] sm:$0xf] %vm655, %v1011
        %1014 = vrot.lane.b32.xlu0 %v661, 80
        %v1015 = vpop.permute.xlu0 %1014
        %1016 = vrot.lane.b32.xlu0 %v662, 80
        %v1017 = vpop.permute.xlu0 %1016
        %s1020 = scalar_lea.vmem %s378, 48
        %1021 = vst.msk [vmem:[%s1020] sm:$0xf] %vm619, %v1015
        %1022 = vst.msk [vmem:[%s1020 + $0x4] sm:$0xf] %vm619, %v1017
        %1023 = vrot.lane.b32.xlu0 %v615, 72
        %v1024 = vpop.permute.xlu0 %1023
        %1025 = vrot.lane.b32.xlu0 %v616, 72
        %v1026 = vpop.permute.xlu0 %1025
        %s1029 = scalar_lea.vmem %s368, 56
        %1030 = vst.msk [vmem:[%s1029] sm:$0xf] %vm619, %v1024
        %1031 = vst.msk [vmem:[%s1029 + $0x4] sm:$0xf] %vm619, %v1026
        %1032 = vrot.lane.b32.xlu0 %v532, 72
        %v1033 = vpop.permute.xlu0 %1032
        %1034 = vrot.lane.b32.xlu0 %v535, 72
        %v1035 = vpop.permute.xlu0 %1034
        %1038 = vxpose.xlu0.b32.start [1/16] %v1033, 128
        %1039 = vxpose.xlu0.b32.cont [2/16] %v1035, 128
        %1040 = vxpose.xlu0.b32.cont [3/16] 0.0, 128
        %1041 = vxpose.xlu0.b32.cont [4/16] 0.0, 128
        %1042 = vxpose.xlu0.b32.cont [5/16] 0.0, 128
        %1043 = vxpose.xlu0.b32.cont [6/16] 0.0, 128
        %1044 = vxpose.xlu0.b32.cont [7/16] 0.0, 128
        %1045 = vxpose.xlu0.b32.cont [8/16] 0.0, 128
        %1046 = vxpose.xlu0.b32.cont [9/16] 0.0, 128
        %1047 = vxpose.xlu0.b32.cont [10/16] 0.0, 128
        %1048 = vxpose.xlu0.b32.cont [11/16] 0.0, 128
        %1049 = vxpose.xlu0.b32.cont [12/16] 0.0, 128
        %1050 = vxpose.xlu0.b32.cont [13/16] 0.0, 128
        %1051 = vxpose.xlu0.b32.cont [14/16] 0.0, 128
        %1052 = vxpose.xlu0.b32.cont [15/16] 0.0, 128
        %1053 = vxpose.xlu0.b32.end [16/16] 0.0, 128
        %v1054 = vpop.trf.xlu0
        %v1055 = vpop.trf.xlu0
        %v1056 = vpop.trf.xlu0
        %v1057 = vpop.trf.xlu0
        %v1058 = vpop.trf.xlu0
        %v1059 = vpop.trf.xlu0
        %v1060 = vpop.trf.xlu0
        %v1061 = vpop.trf.xlu0
        %v1062 = vpop.trf.xlu0
        %v1063 = vpop.trf.xlu0
        %v1064 = vpop.trf.xlu0
        %v1065 = vpop.trf.xlu0
        %v1066 = vpop.trf.xlu0
        %v1067 = vpop.trf.xlu0
        %v1068 = vpop.trf.xlu0
        %v1069 = vpop.trf.xlu0
        %v1070 = vpack.c.bf16 %v1054, %v1054
        %s1071 = scalar_lea.vmem %s347, 28 [#allocation10]
        %1072 = vst.msk [vmem:[%s1071] sm:$0xf] %vm655, %v1070
        %1073 = vrot.lane.b32.xlu0 %v661, 72
        %v1074 = vpop.permute.xlu0 %1073
        %1075 = vrot.lane.b32.xlu0 %v662, 72
        %v1076 = vpop.permute.xlu0 %1075
        %s1079 = scalar_lea.vmem %s378, 56
        %1080 = vst.msk [vmem:[%s1079] sm:$0xf] %vm619, %v1074
        %1081 = vst.msk [vmem:[%s1079 + $0x4] sm:$0xf] %vm619, %v1076
        %s1082 = smul.u32 2, %s31
        %p1083 = scmp.lt.s32.totalorder %s30, 1
        %s1084 = scalar_select %p1083, %s30, 1
        %p1085 = scmp.lt.s32.totalorder %s1082, 1
        %s1086 = scalar_select %p1085, %s1082, 1
        %s1087 = smul.addr %s1084, 16
        %s1088 = sadd.s32 %s1086, %s1087
        %s1089 = smul.addr %s1088, 4
        %s1090 = scalar_lea.vmem %s4, %s1089
        %s1091 = sand.u32 %s167, 1
        %s1092 = scalar_lea.sflag [#allocation4], %s1091
        %s1093 = sand.u32 %s167, 1
        %s1094 = smul.addr %s1093, 32
        %s1095 = scalar_lea.vmem [#allocation10], %s1094
        %s1096 = smul.u32 2, %s31
        %p1097 = scmp.lt.s32.totalorder %s30, 1
        %s1098 = scalar_select %p1097, %s30, 1
        %p1099 = scmp.lt.s32.totalorder %s1096, 1
        %s1100 = scalar_select %p1099, %s1096, 1
        %s1101 = smul.addr %s1098, 16
        %s1102 = sadd.s32 %s1100, %s1101
        %s1103 = smul.addr %s1102, 4
        %s1104 = scalar_lea.vmem %s6, %s1103
        // Predicated region
        $region53: #{tpu_custom_call.1} parent=35 // pred_check
          %p1105 = pneg %p149
        $region54: #{tpu_custom_call.1} parent=35 // pred_check_branch
          %1107 = sbr.rel (%p1105) target = $region56
        $region55: #{tpu_custom_call.1} parent=35 // pred_region
          %s1108 = smul.u32 2, %s31
        $region56: #{tpu_custom_call.1} parent=35 // pred_fallthru
          _
        // Predicated region
        $region57: #{tpu_custom_call.1} parent=35 // pred_check
          %p1109 = pneg %p177
        $region58: #{tpu_custom_call.1} parent=35 // pred_check_branch
          %1111 = sbr.rel (%p1109) target = $region60
        $region59: #{tpu_custom_call.1} parent=35 // pred_region
          %s1113 = ssub.s32 512, 512
          %1114 = vsyncadd %s1092, %s1113
          %s1115 = smul.addr %s30, 8
          %s1116 = sadd.s32 %s31, %s1115
          %s1117 = smul.addr %s1116, 64
          %s1118 = scalar_lea.hbm %s5, %s1117
          %s1119 = sshll.u32 %s1095, 4
          %s1120 = int_to_ptr.vmem [resolvable:$true] %s1119
          %1125 = dma.vmem_to_hbm [thread:$0]  %s1120, 512, %s1118, %s1092, 64, 64, 4
        $region60: #{tpu_custom_call.1} parent=35 // pred_fallthru
          _
        // Predicated region
        $region61: #{tpu_custom_call.1} parent=35 // pred_check
          %p1126 = pneg %p205
        $region62: #{tpu_custom_call.1} parent=35 // pred_check_branch
          %1128 = sbr.rel (%p1126) target = $region64
        $region63: #{tpu_custom_call.1} parent=35 // pred_region
          %s1129 = smul.u32 2, %s31
        $region64: #{tpu_custom_call.1} parent=35 // pred_fallthru
          _
      $region36: #{tpu_custom_call.1} parent=5 // pred_fallthru
        _
      %p1130 = scmp.le.s32.totalorder 2, %s21
      // Predicated region
      $region65: #{tpu_custom_call.1} parent=5 // pred_check
        %p1131 = pneg %p1130
      $region66: #{tpu_custom_call.1} parent=5 // pred_check_branch
        %1133 = sbr.rel (%p1131) target = $region68
      $region67: #{tpu_custom_call.1} parent=5 // pred_region
        %s1134 = ssub.s32 %s21, 2
        // Predicated region
        $region69: #{tpu_custom_call.1} parent=67 // pred_check
          %p1135 = pneg %p155
        $region70: #{tpu_custom_call.1} parent=67 // pred_check_branch
          %1137 = sbr.rel (%p1135) target = $region72
        $region71: #{tpu_custom_call.1} parent=67 // pred_region
          %s1138 = smul.u32 2, %s33
          %p1139 = scmp.lt.s32.totalorder %s32, 1
          %s1140 = scalar_select %p1139, %s32, 1
          %p1141 = scmp.lt.s32.totalorder %s1138, 1
          %s1142 = scalar_select %p1141, %s1138, 1
          %s1143 = smul.addr %s1140, 16
          %s1144 = sadd.s32 %s1142, %s1143
          %s1145 = smul.addr %s1144, 4
          %s1146 = scalar_lea.vmem %s4, %s1145
        $region72: #{tpu_custom_call.1} parent=67 // pred_fallthru
          _
        // Predicated region
        $region73: #{tpu_custom_call.1} parent=67 // pred_check
          %p1147 = pneg %p183
        $region74: #{tpu_custom_call.1} parent=67 // pred_check_branch
          %1149 = sbr.rel (%p1147) target = $region76
        $region75: #{tpu_custom_call.1} parent=67 // pred_region
          %s1150 = sand.u32 %s168, 1
          %s1151 = scalar_lea.sflag [#allocation4], %s1150
          %s1152 = sand.u32 %s168, 1
          %s1153 = smul.addr %s1152, 32
          %s1154 = scalar_lea.vmem [#allocation10], %s1153
          %1155 = dma.done %s1151, 512
        $region76: #{tpu_custom_call.1} parent=67 // pred_fallthru
          _
        // Predicated region
        $region77: #{tpu_custom_call.1} parent=67 // pred_check
          %p1156 = pneg %p211
        $region78: #{tpu_custom_call.1} parent=67 // pred_check_branch
          %1158 = sbr.rel (%p1156) target = $region80
        $region79: #{tpu_custom_call.1} parent=67 // pred_region
          %s1159 = smul.u32 2, %s33
          %p1160 = scmp.lt.s32.totalorder %s32, 1
          %s1161 = scalar_select %p1160, %s32, 1
          %p1162 = scmp.lt.s32.totalorder %s1159, 1
          %s1163 = scalar_select %p1162, %s1159, 1
          %s1164 = smul.addr %s1161, 16
          %s1165 = sadd.s32 %s1163, %s1164
          %s1166 = smul.addr %s1165, 4
          %s1167 = scalar_lea.vmem %s6, %s1166
        $region80: #{tpu_custom_call.1} parent=67 // pred_fallthru
          _
      $region68: #{tpu_custom_call.1} parent=5 // pred_fallthru
        _
    $region6: #{tpu_custom_call.1} parent=1 // loop_footer
      %s25 = sadd.s32 1, %s21
    $region7: #{tpu_custom_call.1} parent=1 // loop_footer_branch
      %20 = sbr.rel target = $region3
    $region8: #{tpu_custom_call.1} parent=1 // loop_exit
      _
    %1168 = vsyncpa [#allocation3], 1
    %s1169 = scalar_lea.sflag [#allocation3], 1
    %1170 = vsyncpa %s1169, 1
    %1171 = vsyncpa [#allocation6], 1
    %1172 = vsyncpa [#allocation9], 1
    %1173 = vsyncpa [#allocation4], 1
    %s1174 = scalar_lea.sflag [#allocation4], 1
    %1175 = vsyncpa %s1174, 1

</llo_original>
